<compile_context>
chip_gen: v6e
topology: v6e:2x2x1
jax: 0.10.0
libtpu: 0.0.40
codegen_flags: <defaults>
</compile_context>

<pallas_src>
import math
import functools

import jax
import jax.numpy as jnp
import numpy as np
from jax import lax
from jax.experimental import pallas as pl
from jax.experimental.pallas import tpu as pltpu


# ----------------------------------------------------------------------------- helpers
def _round_up(n, m):
    return ((n + m - 1) // m) * m


def _layernorm_masked(xv, gamma, beta, n_true, n_pad, eps=1e-5):
    """Two-pass LayerNorm over the last axis.  Padded lanes (>= n_true) hold zeros in xv
    and zeros in gamma/beta; moments are taken over the TRUE feature count."""
    inv_n = 1.0 / float(n_true)
    mu = jnp.sum(xv, axis=-1, keepdims=True) * inv_n
    xc = xv - mu
    if n_pad != n_true:
        lane = lax.broadcasted_iota(jnp.int32, xv.shape, xv.ndim - 1)
        xc = jnp.where(lane < n_true, xc, 0.0)
    var = jnp.sum(xc * xc, axis=-1, keepdims=True) * inv_n
    return xc * lax.rsqrt(var + eps) * gamma + beta


# ----------------------------------------------------------------------------- kernel
def transformer_block_kernel(
    x_ref,                       # (block_b, t, ep)      input dtype
    wqkv_ref,                    # (ep, 3*h*ep)          bf16  (Wq pre-scaled by 1/sqrt(e))
    wo_ref,                      # (h*ep, ep)            bf16
    bo_ref,                      # (1, ep)               f32
    g1_ref, b1_ref,              # (1, ep)               f32   LayerNorm 1
    w1_ref,                      # (ep, ffp)             bf16
    bb1_ref,                     # (1, ffp)              f32
    w2_ref,                      # (ffp, ep)             bf16
    bb2_ref,                     # (1, ep)               f32
    g2_ref, b2_ref,              # (1, ep)               f32   LayerNorm 2
    o_ref,                       # (block_b, t, ep)
    att_ref,                     # VMEM scratch (block_b*t, ep) f32
    ctx_ref,                     # VMEM scratch (t, h*ep)       f32
    *, heads, e_true, e_pad, seq, block_b,
):
    h = heads
    ep = e_pad
    t = seq
    hep = h * ep
    rows = block_b * t

    x = x_ref[...].reshape(rows, ep).astype(jnp.float32)

    # Fused QKV projection: one bf16 MXU pass, f32 accumulation.
    qkv = jnp.dot(x.astype(jnp.bfloat16), wqkv_ref[...],
                  preferred_element_type=jnp.float32)          # (rows, 3*hep) f32

    wo = wo_ref[...]                                           # (h*ep, ep) bf16

    def attn_batch(bi):
        # Slice the f32 qkv rows (8-row sublane tiles -> aligned for any bi when t % 8 == 0),
        # then cast the per-batch tile to bf16 once.
        if isinstance(bi, int):
            start = bi * t
            qkv_b = qkv[start:start + t, :]
        else:
            start = pl.multiple_of(bi * t, t)
            qkv_b = lax.dynamic_slice_in_dim(qkv, start, t, axis=0)
        qkv_b = qkv_b.astype(jnp.bfloat16)                     # (t, 3*hep)

        for hi in range(h):                                    # small head loop: unrolled
            c0 = hi * ep
            qh = qkv_b[:, c0:c0 + ep]                          # (t, ep)
            kh = qkv_b[:, hep + c0:hep + c0 + ep]              # (t, ep)
            vh = qkv_b[:, 2 * hep + c0:2 * hep + c0 + ep]      # (t, ep)

            s = lax.dot_general(qh, kh, (((1,), (1,)), ((), ())),
                                preferred_element_type=jnp.float32)   # (t, t)
            s = s - jnp.max(s, axis=-1, keepdims=True)
            p = jnp.exp(s)
            denom = jnp.sum(p, axis=-1, keepdims=True)
            ctx = jnp.dot(p.astype(jnp.bfloat16), vh,
                          preferred_element_type=jnp.float32)         # (t, ep)
            # Normalize after PV: t*ep multiplies instead of t*t.
            ctx_ref[:, c0:c0 + ep] = ctx * pl.reciprocal(denom, approx=True)

        # One fused output projection: contraction depth h*ep (>= 256 on v6e/v7x MXUs).
        att_ref[pl.ds(start, t), :] = jnp.dot(
            ctx_ref[...].astype(jnp.bfloat16), wo,
            preferred_element_type=jnp.float32)

    if block_b == 1:
        attn_batch(0)
    else:
        def body(bi, carry):
            attn_batch(bi)
            return carry
        lax.fori_loop(0, block_b, body, 0)

    attended = att_ref[...] + bo_ref[...]

    # residual + LayerNorm 1 (dropout = identity)
    y1 = _layernorm_masked(attended + x, g1_ref[...], b1_ref[...], e_true, ep)

    # Feed-forward: Linear -> ReLU -> Linear (bf16 MXU operands, f32 accumulation)
    hdn = jnp.dot(y1.astype(jnp.bfloat16), w1_ref[...],
                  preferred_element_type=jnp.float32) + bb1_ref[...]
    hdn = jnp.maximum(hdn, 0.0)
    ff = jnp.dot(hdn.astype(jnp.bfloat16), w2_ref[...],
                 preferred_element_type=jnp.float32) + bb2_ref[...]

    # residual + LayerNorm 2 (dropout = identity)
    y2 = _layernorm_masked(ff + y1, g2_ref[...], b2_ref[...], e_true, ep)

    o_ref[...] = y2.reshape(block_b, t, ep).astype(o_ref.dtype)


# ----------------------------------------------------------------------------- wrapper
def _pack_params(params, emb, heads):
    """Pad emb/ff to multiples of 128, fold 1/sqrt(e) into Wq, fuse QKV, cast to bf16."""
    (wk, wq, wv, wo, bo, g1, b1, w1, bb1, w2, bb2, g2, b2) = params
    e, h = emb, heads
    ffh = w1.shape[1]
    ep = _round_up(e, 128)
    ffp = _round_up(ffh, 128)

    def pad_head_proj(w):                       # (e, h*e) -> (ep, h*ep), per-head padded
        w3 = w.reshape(e, h, e)
        w3 = jnp.pad(w3, ((0, ep - e), (0, 0), (0, ep - e)))
        return w3.reshape(ep, h * ep)

    scale = 1.0 / math.sqrt(e)
    wq_p = pad_head_proj(wq) * scale            # fold attention scale into Wq
    wk_p = pad_head_proj(wk)
    wv_p = pad_head_proj(wv)
    wqkv = jnp.concatenate([wq_p, wk_p, wv_p], axis=1).astype(jnp.bfloat16)

    wo3 = wo.reshape(h, e, e)
    wo3 = jnp.pad(wo3, ((0, 0), (0, ep - e), (0, ep - e)))
    wo_p = wo3.reshape(h * ep, ep).astype(jnp.bfloat16)

    def pad_vec(v, n):                          # (1, k) -> (1, n), zero-padded
        return jnp.pad(v, ((0, 0), (0, n - v.shape[1])))

    return dict(
        wqkv=wqkv,
        wo=wo_p,
        bo=pad_vec(bo, ep),
        g1=pad_vec(g1, ep), b1=pad_vec(b1, ep),
        w1=jnp.pad(w1, ((0, ep - e), (0, ffp - ffh))).astype(jnp.bfloat16),
        bb1=pad_vec(bb1, ffp),
        w2=jnp.pad(w2, ((0, ffp - ffh), (0, ep - e))).astype(jnp.bfloat16),
        bb2=pad_vec(bb2, ep),
        g2=pad_vec(g2, ep), b2=pad_vec(b2, ep),
        e_pad=ep, ff_pad=ffp,
    )


def _vmem_ceiling_bytes():
    """85% of the chip's physical VMEM; conservative 64 MiB (v7x) fallback."""
    try:
        cap = int(pltpu.get_tpu_info().vmem_capacity_bytes)
    except Exception:
        cap = 64 << 20
    return int(cap * 0.85)


def _choose_block_b(b, t, target_rows=512):
    """Largest divisor of b with rows <= target_rows that keeps >= 2 grid steps (when
    batch >= 2) so both v7x TensorCores get work."""
    best = 1
    for cand in range(1, b + 1):
        if b % cand != 0 or cand * t > target_rows:
            continue
        if b >= 2 and b // cand < 2:
            continue
        best = cand
    return best


def transformer_block(x, params, *, heads, block_b=None):
    b, t, e = x.shape
    h = heads
    packed = _pack_params(params, e, heads)
    ep, ffp = packed["e_pad"], packed["ff_pad"]
    hep = h * ep

    if block_b is None:
        block_b = _choose_block_b(b, t)
    assert b % block_b == 0, "block_b must divide batch"
    grid = (b // block_b,)
    rows = block_b * t

    x_p = x if ep == e else jnp.pad(x, ((0, 0), (0, 0), (0, ep - e)))

    def const_spec(shape):
        nd = len(shape)
        # Block index never changes across the grid -> single-buffer (halves weight VMEM).
        return pl.BlockSpec(shape, lambda i, nd=nd: (0,) * nd,
                            pipeline_mode=pl.Buffered(1))

    in_specs = [
        pl.BlockSpec((block_b, t, ep), lambda i: (i, 0, 0)),   # x
        const_spec((ep, 3 * hep)),   # Wqkv (bf16)
        const_spec((hep, ep)),       # Wo   (bf16)
        const_spec((1, ep)),         # bo
        const_spec((1, ep)),         # gamma1
        const_spec((1, ep)),         # beta1
        const_spec((ep, ffp)),       # W1   (bf16)
        const_spec((1, ffp)),        # b1 (ff)
        const_spec((ffp, ep)),       # W2   (bf16)
        const_spec((1, ep)),         # b2 (ff)
        const_spec((1, ep)),         # gamma2
        const_spec((1, ep)),         # beta2
    ]

    # ---- VMEM budget: single-buffered bf16 weights + live activations + 15% headroom ----
    itemsize = x.dtype.itemsize
    w_bytes = 2 * (ep * 3 * hep + hep * ep + ep * ffp + ffp * ep)      # bf16, one buffer
    vec_bytes = 4 * (8 * ep + ffp)
    act_bytes = (4 * rows * ep                 # x f32
                 + 2 * rows * ep               # x bf16 (QKV operand)
                 + 4 * rows * 3 * hep          # qkv f32
                 + 2 * t * 3 * hep             # per-batch qkv bf16
                 + 2 * 4 * t * t               # s, p f32
                 + 4 * t * ep                  # ctx f32
                 + 4 * rows * (4 * ep + ffp)   # attended, y1, ff, y2, hdn f32
                 + 2 * rows * (ep + ffp))      # bf16 casts of y1, hdn
    scratch_bytes = 4 * rows * ep + 4 * t * hep
    io_bytes = 2 * 2 * rows * ep * itemsize    # double-buffered x / out blocks
    est = int(1.15 * (w_bytes + vec_bytes + act_bytes + scratch_bytes + io_bytes))
    vmem_limit = int(min(max(est, 32 << 20), _vmem_ceiling_bytes()))

    kernel = functools.partial(
        transformer_block_kernel,
        heads=h, e_true=e, e_pad=ep, seq=t, block_b=block_b)

    out = pl.pallas_call(
        kernel,
        out_shape=jax.ShapeDtypeStruct((b, t, ep), x.dtype),
        grid=grid,
        in_specs=in_specs,
        out_specs=pl.BlockSpec((block_b, t, ep), lambda i: (i, 0, 0)),
        scratch_shapes=[pltpu.VMEM((rows, ep), jnp.float32),
                        pltpu.VMEM((t, hep), jnp.float32)],
        compiler_params=pltpu.CompilerParams(
            dimension_semantics=("parallel",),
            vmem_limit_bytes=vmem_limit),
    )(x_p, packed["wqkv"], packed["wo"], packed["bo"],
      packed["g1"], packed["b1"], packed["w1"], packed["bb1"],
      packed["w2"], packed["bb2"], packed["g2"], packed["b2"])

    return out[..., :e] if ep != e else out


# ----------------------------------------------------------------------------- reference
def _layernorm_ref(x, gamma, beta, eps=1e-5):
    mu = jnp.mean(x, axis=-1, keepdims=True)
    var = jnp.mean((x - mu) ** 2, axis=-1, keepdims=True)
    return (x - mu) / jnp.sqrt(var + eps) * gamma + beta


def transformer_block_ref(x, params, *, heads):
    """Pure-JAX f32 reference mirroring the PyTorch forward (eval mode)."""
    (wk, wq, wv, wo, bo, g1, b1, w1, bb1, w2, bb2, g2, b2) = params
    bsz, t, e = x.shape
    h = heads
    k = (x @ wk).reshape(bsz, t, h, e).transpose(0, 2, 1, 3)
    q = (x @ wq).reshape(bsz, t, h, e).transpose(0, 2, 1, 3)
    v = (x @ wv).reshape(bsz, t, h, e).transpose(0, 2, 1, 3)
    q = q / math.sqrt(e)
    dot = jnp.einsum("bhqe,bhke->bhqk", q, k)
    attn = jax.nn.softmax(dot, axis=-1)
    ctx = jnp.einsum("bhqk,bhke->bhqe", attn, v)
    ctx = ctx.transpose(0, 2, 1, 3).reshape(bsz, t, h * e)
    attended = ctx @ wo + bo[0]
    y1 = _layernorm_ref(attended + x, g1[0], b1[0])
    ff = jnp.maximum(y1 @ w1 + bb1[0], 0.0) @ w2 + bb2[0]
    return _layernorm_ref(ff + y1, g2[0], b2[0])


def init_params(key, emb, heads, ff_hidden_mult):
    he = emb * heads
    ffh = ff_hidden_mult * emb
    ks = jax.random.split(key, 8)
    s = 0.05
    wk = jax.random.normal(ks[0], (emb, he), jnp.float32) * s
    wq = jax.random.normal(ks[1], (emb, he), jnp.float32) * s
    wv = jax.random.normal(ks[2], (emb, he), jnp.float32) * s
    wo = jax.random.normal(ks[3], (he, emb), jnp.float32) * s
    bo = jax.random.normal(ks[4], (1, emb), jnp.float32) * s
    g1 = jnp.ones((1, emb), jnp.float32)
    b1 = jnp.zeros((1, emb), jnp.float32)
    w1 = jax.random.normal(ks[5], (emb, ffh), jnp.float32) * s
    bb1 = jax.random.normal(ks[6], (1, ffh), jnp.float32) * s
    w2 = jax.random.normal(ks[7], (ffh, emb), jnp.float32) * s
    bb2 = jnp.zeros((1, emb), jnp.float32)
    g2 = jnp.ones((1, emb), jnp.float32)
    b2 = jnp.zeros((1, emb), jnp.float32)
    return (wk, wq, wv, wo, bo, g1, b1, w1, bb1, w2, bb2, g2, b2)


if __name__ == "__main__":
    def run_case(batch, seq, emb, heads, ff_mult, seed, block_b=None):
        key = jax.random.PRNGKey(seed)
        kx, kp = jax.random.split(key)
        x = jax.random.normal(kx, (batch, seq, emb), jnp.float32)
        params = init_params(kp, emb, heads, ff_mult)
        out = jax.block_until_ready(
            transformer_block(x, params, heads=heads, block_b=block_b))
        ref = transformer_block_ref(x, params, heads=heads)
        # bf16 MXU operands + approx reciprocal/rsqrt -> loosened tolerance.
        np.testing.assert_allclose(np.asarray(out), np.asarray(ref),
                                   rtol=2e-2, atol=2e-2)

    # Main case: lane-dense shapes (module default emb=128); grid=(2,) -> both TCs busy.
    run_case(batch=2, seq=8, emb=128, heads=2, ff_mult=4, seed=0)
    # Secondary case: exercises wrapper lane-padding (emb 32 -> 128) and block_b > 1
    # (fori_loop + dynamic row-slice path).
    run_case(batch=2, seq=8, emb=32, heads=2, ff_mult=4, seed=1, block_b=2)

    print("KERNEL_OK")
</pallas_src>

<mosaic_0001>
module attributes {stable_mosaic.version = 11 : i64} {
  func.func @transformer_block_kernel(%arg0: i32, %arg1: memref<1x8x128xf32, #tpu.memory_space<vmem>>, %arg2: memref<128x768xbf16, #tpu.memory_space<vmem>>, %arg3: memref<256x128xbf16, #tpu.memory_space<vmem>>, %arg4: memref<1x128xf32, #tpu.memory_space<vmem>>, %arg5: memref<1x128xf32, #tpu.memory_space<vmem>>, %arg6: memref<1x128xf32, #tpu.memory_space<vmem>>, %arg7: memref<128x512xbf16, #tpu.memory_space<vmem>>, %arg8: memref<1x512xf32, #tpu.memory_space<vmem>>, %arg9: memref<512x128xbf16, #tpu.memory_space<vmem>>, %arg10: memref<1x128xf32, #tpu.memory_space<vmem>>, %arg11: memref<1x128xf32, #tpu.memory_space<vmem>>, %arg12: memref<1x128xf32, #tpu.memory_space<vmem>>, %arg13: memref<1x8x128xf32, #tpu.memory_space<vmem>>, %arg14: memref<8x128xf32, #tpu.memory_space<vmem>>, %arg15: memref<8x256xf32, #tpu.memory_space<vmem>>) attributes {dimension_semantics = [#tpu.dimension_semantics<parallel>], iteration_bounds = array<i64: 2>, scalar_prefetch = 0 : i64, scratch_operands = 2 : i64, tpu.core_type = #tpu.core_type<tc>, window_params = [{transform_indices = @transform_0, window_bounds = array<i64: 1, 8, 128>}, {pipeline_mode = #tpu.pipeline_mode<synchronous>, transform_indices = @transform_1, window_bounds = array<i64: 128, 768>}, {pipeline_mode = #tpu.pipeline_mode<synchronous>, transform_indices = @transform_2, window_bounds = array<i64: 256, 128>}, {pipeline_mode = #tpu.pipeline_mode<synchronous>, transform_indices = @transform_3, window_bounds = array<i64: 1, 128>}, {pipeline_mode = #tpu.pipeline_mode<synchronous>, transform_indices = @transform_4, window_bounds = array<i64: 1, 128>}, {pipeline_mode = #tpu.pipeline_mode<synchronous>, transform_indices = @transform_5, window_bounds = array<i64: 1, 128>}, {pipeline_mode = #tpu.pipeline_mode<synchronous>, transform_indices = @transform_6, window_bounds = array<i64: 128, 512>}, {pipeline_mode = #tpu.pipeline_mode<synchronous>, transform_indices = @transform_7, window_bounds = array<i64: 1, 512>}, {pipeline_mode = #tpu.pipeline_mode<synchronous>, transform_indices = @transform_8, window_bounds = array<i64: 512, 128>}, {pipeline_mode = #tpu.pipeline_mode<synchronous>, transform_indices = @transform_9, window_bounds = array<i64: 1, 128>}, {pipeline_mode = #tpu.pipeline_mode<synchronous>, transform_indices = @transform_10, window_bounds = array<i64: 1, 128>}, {pipeline_mode = #tpu.pipeline_mode<synchronous>, transform_indices = @transform_11, window_bounds = array<i64: 1, 128>}, {transform_indices = @transform_12, window_bounds = array<i64: 1, 8, 128>}]} {
    %c0 = arith.constant 0 : index
    %c0_0 = arith.constant 0 : index
    %c0_1 = arith.constant 0 : index
    %0 = vector.load %arg1[%c0, %c0_0, %c0_1] : memref<1x8x128xf32, #tpu.memory_space<vmem>>, vector<1x8x128xf32>
    %1 = vector.shape_cast %0 : vector<1x8x128xf32> to vector<8x128xf32>
    %2 = arith.truncf %1 : vector<8x128xf32> to vector<8x128xbf16>
    %c0_2 = arith.constant 0 : index
    %c0_3 = arith.constant 0 : index
    %3 = vector.load %arg2[%c0_2, %c0_3] : memref<128x768xbf16, #tpu.memory_space<vmem>>, vector<128x768xbf16>
    %cst = arith.constant dense<0.000000e+00> : vector<8x768xf32>
    %4 = tpu.matmul %2, %3, %cst {dimension_numbers = #tpu.dot_dimension_numbers<[1], [0], [0], [1], [0, 0, 1, 1], [], []>} : vector<8x128xbf16>, vector<128x768xbf16>, vector<8x768xf32> -> vector<8x768xf32>
    %c0_4 = arith.constant 0 : index
    %c0_5 = arith.constant 0 : index
    %5 = vector.load %arg3[%c0_4, %c0_5] : memref<256x128xbf16, #tpu.memory_space<vmem>>, vector<256x128xbf16>
    %6 = arith.truncf %4 : vector<8x768xf32> to vector<8x768xbf16>
    %7 = vector.extract_strided_slice %6 {offsets = [0, 0], sizes = [8, 128], strides = [1, 1]} : vector<8x768xbf16> to vector<8x128xbf16>
    %8 = vector.extract_strided_slice %6 {offsets = [0, 256], sizes = [8, 128], strides = [1, 1]} : vector<8x768xbf16> to vector<8x128xbf16>
    %9 = vector.extract_strided_slice %6 {offsets = [0, 512], sizes = [8, 128], strides = [1, 1]} : vector<8x768xbf16> to vector<8x128xbf16>
    %cst_6 = arith.constant dense<0.000000e+00> : vector<8x8xf32>
    %10 = tpu.matmul %7, %8, %cst_6 {dimension_numbers = #tpu.dot_dimension_numbers<[1], [1], [0], [0], [0, 0, 1, 0], [], []>} : vector<8x128xbf16>, vector<8x128xbf16>, vector<8x8xf32> -> vector<8x8xf32>
    %cst_7 = arith.constant dense<0xFF800000> : vector<8xf32>
    %11 = vector.multi_reduction <maximumf>, %10, %cst_7 [1] : vector<8x8xf32> to vector<8xf32>
    %12 = vector.shape_cast %11 : vector<8xf32> to vector<8x1xf32>
    %13 = vector.broadcast %12 : vector<8x1xf32> to vector<8x8xf32>
    %14 = arith.subf %10, %13 : vector<8x8xf32>
    %15 = math.exp %14 : vector<8x8xf32>
    %cst_8 = arith.constant dense<0.000000e+00> : vector<8xf32>
    %16 = vector.multi_reduction <add>, %15, %cst_8 [1] : vector<8x8xf32> to vector<8xf32>
    %17 = vector.shape_cast %16 : vector<8xf32> to vector<8x1xf32>
    %18 = arith.truncf %15 : vector<8x8xf32> to vector<8x8xbf16>
    %cst_9 = arith.constant dense<0.000000e+00> : vector<8x128xf32>
    %19 = tpu.matmul %18, %9, %cst_9 {dimension_numbers = #tpu.dot_dimension_numbers<[1], [0], [0], [1], [0, 0, 1, 1], [], []>} : vector<8x8xbf16>, vector<8x128xbf16>, vector<8x128xf32> -> vector<8x128xf32>
    %20 = tpu.reciprocal %17 {approx = true} : vector<8x1xf32> -> vector<8x1xf32>
    %21 = vector.broadcast %20 : vector<8x1xf32> to vector<8x128xf32>
    %22 = arith.mulf %19, %21 : vector<8x128xf32>
    %c0_10 = arith.constant 0 : index
    %c0_11 = arith.constant 0 : index
    %23 = vector.load %arg15[%c0_10, %c0_11] : memref<8x256xf32, #tpu.memory_space<vmem>>, vector<8x128xf32>
    tpu.vector_store %arg15[%c0_10, %c0_11], %22 {strides = array<i32>} : memref<8x256xf32, #tpu.memory_space<vmem>>, vector<8x128xf32>,
    %24 = vector.extract_strided_slice %6 {offsets = [0, 128], sizes = [8, 128], strides = [1, 1]} : vector<8x768xbf16> to vector<8x128xbf16>
    %25 = vector.extract_strided_slice %6 {offsets = [0, 384], sizes = [8, 128], strides = [1, 1]} : vector<8x768xbf16> to vector<8x128xbf16>
    %26 = vector.extract_strided_slice %6 {offsets = [0, 640], sizes = [8, 128], strides = [1, 1]} : vector<8x768xbf16> to vector<8x128xbf16>
    %cst_12 = arith.constant dense<0.000000e+00> : vector<8x8xf32>
    %27 = tpu.matmul %24, %25, %cst_12 {dimension_numbers = #tpu.dot_dimension_numbers<[1], [1], [0], [0], [0, 0, 1, 0], [], []>} : vector<8x128xbf16>, vector<8x128xbf16>, vector<8x8xf32> -> vector<8x8xf32>
    %cst_13 = arith.constant dense<0xFF800000> : vector<8xf32>
    %28 = vector.multi_reduction <maximumf>, %27, %cst_13 [1] : vector<8x8xf32> to vector<8xf32>
    %29 = vector.shape_cast %28 : vector<8xf32> to vector<8x1xf32>
    %30 = vector.broadcast %29 : vector<8x1xf32> to vector<8x8xf32>
    %31 = arith.subf %27, %30 : vector<8x8xf32>
    %32 = math.exp %31 : vector<8x8xf32>
    %cst_14 = arith.constant dense<0.000000e+00> : vector<8xf32>
    %33 = vector.multi_reduction <add>, %32, %cst_14 [1] : vector<8x8xf32> to vector<8xf32>
    %34 = vector.shape_cast %33 : vector<8xf32> to vector<8x1xf32>
    %35 = arith.truncf %32 : vector<8x8xf32> to vector<8x8xbf16>
    %cst_15 = arith.constant dense<0.000000e+00> : vector<8x128xf32>
    %36 = tpu.matmul %35, %26, %cst_15 {dimension_numbers = #tpu.dot_dimension_numbers<[1], [0], [0], [1], [0, 0, 1, 1], [], []>} : vector<8x8xbf16>, vector<8x128xbf16>, vector<8x128xf32> -> vector<8x128xf32>
    %37 = tpu.reciprocal %34 {approx = true} : vector<8x1xf32> -> vector<8x1xf32>
    %38 = vector.broadcast %37 : vector<8x1xf32> to vector<8x128xf32>
    %39 = arith.mulf %36, %38 : vector<8x128xf32>
    %c0_16 = arith.constant 0 : index
    %c128 = arith.constant 128 : index
    %40 = vector.load %arg15[%c0_16, %c128] : memref<8x256xf32, #tpu.memory_space<vmem>>, vector<8x128xf32>
    tpu.vector_store %arg15[%c0_16, %c128], %39 {strides = array<i32>} : memref<8x256xf32, #tpu.memory_space<vmem>>, vector<8x128xf32>,
    %c0_17 = arith.constant 0 : index
    %c0_18 = arith.constant 0 : index
    %41 = vector.load %arg15[%c0_17, %c0_18] : memref<8x256xf32, #tpu.memory_space<vmem>>, vector<8x256xf32>
    %42 = arith.truncf %41 : vector<8x256xf32> to vector<8x256xbf16>
    %cst_19 = arith.constant dense<0.000000e+00> : vector<8x128xf32>
    %43 = tpu.matmul %42, %5, %cst_19 {dimension_numbers = #tpu.dot_dimension_numbers<[1], [0], [0], [1], [0, 0, 1, 1], [], []>} : vector<8x256xbf16>, vector<256x128xbf16>, vector<8x128xf32> -> vector<8x128xf32>
    %c0_20 = arith.constant 0 : index
    %c0_21 = arith.constant 0 : index
    %44 = vector.load %arg14[%c0_20, %c0_21] : memref<8x128xf32, #tpu.memory_space<vmem>>, vector<8x128xf32>
    tpu.vector_store %arg14[%c0_20, %c0_21], %43 {strides = array<i32>} : memref<8x128xf32, #tpu.memory_space<vmem>>, vector<8x128xf32>,
    %c0_22 = arith.constant 0 : index
    %c0_23 = arith.constant 0 : index
    %45 = vector.load %arg14[%c0_22, %c0_23] : memref<8x128xf32, #tpu.memory_space<vmem>>, vector<8x128xf32>
    %c0_24 = arith.constant 0 : index
    %c0_25 = arith.constant 0 : index
    %46 = vector.load %arg4[%c0_24, %c0_25] : memref<1x128xf32, #tpu.memory_space<vmem>>, vector<1x128xf32>
    %47 = vector.broadcast %46 : vector<1x128xf32> to vector<8x128xf32>
    %48 = arith.addf %45, %47 : vector<8x128xf32>
    %49 = arith.addf %48, %1 : vector<8x128xf32>
    %c0_26 = arith.constant 0 : index
    %c0_27 = arith.constant 0 : index
    %50 = vector.load %arg5[%c0_26, %c0_27] : memref<1x128xf32, #tpu.memory_space<vmem>>, vector<1x128xf32>
    %c0_28 = arith.constant 0 : index
    %c0_29 = arith.constant 0 : index
    %51 = vector.load %arg6[%c0_28, %c0_29] : memref<1x128xf32, #tpu.memory_space<vmem>>, vector<1x128xf32>
    %cst_30 = arith.constant dense<0.000000e+00> : vector<8xf32>
    %52 = vector.multi_reduction <add>, %49, %cst_30 [1] : vector<8x128xf32> to vector<8xf32>
    %53 = vector.shape_cast %52 : vector<8xf32> to vector<8x1xf32>
    %cst_31 = arith.constant 7.812500e-03 : f32
    %54 = vector.broadcast %cst_31 : f32 to vector<8x1xf32>
    %55 = arith.mulf %53, %54 : vector<8x1xf32>
    %56 = vector.broadcast %55 : vector<8x1xf32> to vector<8x128xf32>
    %57 = arith.subf %49, %56 : vector<8x128xf32>
    %58 = arith.mulf %57, %57 : vector<8x128xf32>
    %cst_32 = arith.constant dense<0.000000e+00> : vector<8xf32>
    %59 = vector.multi_reduction <add>, %58, %cst_32 [1] : vector<8x128xf32> to vector<8xf32>
    %60 = vector.shape_cast %59 : vector<8xf32> to vector<8x1xf32>
    %cst_33 = arith.constant 7.812500e-03 : f32
    %61 = vector.broadcast %cst_33 : f32 to vector<8x1xf32>
    %62 = arith.mulf %60, %61 : vector<8x1xf32>
    %cst_34 = arith.constant 9.99999974E-6 : f32
    %63 = vector.broadcast %cst_34 : f32 to vector<8x1xf32>
    %64 = arith.addf %62, %63 : vector<8x1xf32>
    %65 = math.rsqrt %64 : vector<8x1xf32>
    %66 = vector.broadcast %65 : vector<8x1xf32> to vector<8x128xf32>
    %67 = arith.mulf %57, %66 : vector<8x128xf32>
    %68 = vector.broadcast %50 : vector<1x128xf32> to vector<8x128xf32>
    %69 = arith.mulf %67, %68 : vector<8x128xf32>
    %70 = vector.broadcast %51 : vector<1x128xf32> to vector<8x128xf32>
    %71 = arith.addf %69, %70 : vector<8x128xf32>
    %72 = arith.truncf %71 : vector<8x128xf32> to vector<8x128xbf16>
    %c0_35 = arith.constant 0 : index
    %c0_36 = arith.constant 0 : index
    %73 = vector.load %arg7[%c0_35, %c0_36] : memref<128x512xbf16, #tpu.memory_space<vmem>>, vector<128x512xbf16>
    %cst_37 = arith.constant dense<0.000000e+00> : vector<8x512xf32>
    %74 = tpu.matmul %72, %73, %cst_37 {dimension_numbers = #tpu.dot_dimension_numbers<[1], [0], [0], [1], [0, 0, 1, 1], [], []>} : vector<8x128xbf16>, vector<128x512xbf16>, vector<8x512xf32> -> vector<8x512xf32>
    %c0_38 = arith.constant 0 : index
    %c0_39 = arith.constant 0 : index
    %75 = vector.load %arg8[%c0_38, %c0_39] : memref<1x512xf32, #tpu.memory_space<vmem>>, vector<1x512xf32>
    %76 = vector.broadcast %75 : vector<1x512xf32> to vector<8x512xf32>
    %77 = arith.addf %74, %76 : vector<8x512xf32>
    %cst_40 = arith.constant 0.000000e+00 : f32
    %78 = vector.broadcast %cst_40 : f32 to vector<8x512xf32>
    %79 = arith.maximumf %77, %78 : vector<8x512xf32>
    %80 = arith.truncf %79 : vector<8x512xf32> to vector<8x512xbf16>
    %c0_41 = arith.constant 0 : index
    %c0_42 = arith.constant 0 : index
    %81 = vector.load %arg9[%c0_41, %c0_42] : memref<512x128xbf16, #tpu.memory_space<vmem>>, vector<512x128xbf16>
    %cst_43 = arith.constant dense<0.000000e+00> : vector<8x128xf32>
    %82 = tpu.matmul %80, %81, %cst_43 {dimension_numbers = #tpu.dot_dimension_numbers<[1], [0], [0], [1], [0, 0, 1, 1], [], []>} : vector<8x512xbf16>, vector<512x128xbf16>, vector<8x128xf32> -> vector<8x128xf32>
    %c0_44 = arith.constant 0 : index
    %c0_45 = arith.constant 0 : index
    %83 = vector.load %arg10[%c0_44, %c0_45] : memref<1x128xf32, #tpu.memory_space<vmem>>, vector<1x128xf32>
    %84 = vector.broadcast %83 : vector<1x128xf32> to vector<8x128xf32>
    %85 = arith.addf %82, %84 : vector<8x128xf32>
    %86 = arith.addf %85, %71 : vector<8x128xf32>
    %c0_46 = arith.constant 0 : index
    %c0_47 = arith.constant 0 : index
    %87 = vector.load %arg11[%c0_46, %c0_47] : memref<1x128xf32, #tpu.memory_space<vmem>>, vector<1x128xf32>
    %c0_48 = arith.constant 0 : index
    %c0_49 = arith.constant 0 : index
    %88 = vector.load %arg12[%c0_48, %c0_49] : memref<1x128xf32, #tpu.memory_space<vmem>>, vector<1x128xf32>
    %cst_50 = arith.constant dense<0.000000e+00> : vector<8xf32>
    %89 = vector.multi_reduction <add>, %86, %cst_50 [1] : vector<8x128xf32> to vector<8xf32>
    %90 = vector.shape_cast %89 : vector<8xf32> to vector<8x1xf32>
    %cst_51 = arith.constant 7.812500e-03 : f32
    %91 = vector.broadcast %cst_51 : f32 to vector<8x1xf32>
    %92 = arith.mulf %90, %91 : vector<8x1xf32>
    %93 = vector.broadcast %92 : vector<8x1xf32> to vector<8x128xf32>
    %94 = arith.subf %86, %93 : vector<8x128xf32>
    %95 = arith.mulf %94, %94 : vector<8x128xf32>
    %cst_52 = arith.constant dense<0.000000e+00> : vector<8xf32>
    %96 = vector.multi_reduction <add>, %95, %cst_52 [1] : vector<8x128xf32> to vector<8xf32>
    %97 = vector.shape_cast %96 : vector<8xf32> to vector<8x1xf32>
    %cst_53 = arith.constant 7.812500e-03 : f32
    %98 = vector.broadcast %cst_53 : f32 to vector<8x1xf32>
    %99 = arith.mulf %97, %98 : vector<8x1xf32>
    %cst_54 = arith.constant 9.99999974E-6 : f32
    %100 = vector.broadcast %cst_54 : f32 to vector<8x1xf32>
    %101 = arith.addf %99, %100 : vector<8x1xf32>
    %102 = math.rsqrt %101 : vector<8x1xf32>
    %103 = vector.broadcast %102 : vector<8x1xf32> to vector<8x128xf32>
    %104 = arith.mulf %94, %103 : vector<8x128xf32>
    %105 = vector.broadcast %87 : vector<1x128xf32> to vector<8x128xf32>
    %106 = arith.mulf %104, %105 : vector<8x128xf32>
    %107 = vector.broadcast %88 : vector<1x128xf32> to vector<8x128xf32>
    %108 = arith.addf %106, %107 : vector<8x128xf32>
    %109 = vector.shape_cast %108 : vector<8x128xf32> to vector<1x8x128xf32>
    %c0_55 = arith.constant 0 : index
    %c0_56 = arith.constant 0 : index
    %c0_57 = arith.constant 0 : index
    %110 = vector.load %arg13[%c0_55, %c0_56, %c0_57] : memref<1x8x128xf32, #tpu.memory_space<vmem>>, vector<1x8x128xf32>
    tpu.vector_store %arg13[%c0_55, %c0_56, %c0_57], %109 {strides = array<i32>} : memref<1x8x128xf32, #tpu.memory_space<vmem>>, vector<1x8x128xf32>,
    return
  }
  func.func @transform_0(%arg0: i32) -> (i32, i32, i32) {
    %c0_i32 = arith.constant 0 : i32
    %c0_i32_0 = arith.constant 0 : i32
    %c0_i32_1 = arith.constant 0 : i32
    return %arg0, %c0_i32, %c0_i32_0 : i32, i32, i32
  }
  func.func @transform_1(%arg0: i32) -> (i32, i32) {
    %c0_i32 = arith.constant 0 : i32
    %c0_i32_0 = arith.constant 0 : i32
    %c0_i32_1 = arith.constant 0 : i32
    return %c0_i32, %c0_i32_0 : i32, i32
  }
  func.func @transform_2(%arg0: i32) -> (i32, i32) {
    %c0_i32 = arith.constant 0 : i32
    %c0_i32_0 = arith.constant 0 : i32
    %c0_i32_1 = arith.constant 0 : i32
    return %c0_i32, %c0_i32_0 : i32, i32
  }
  func.func @transform_3(%arg0: i32) -> (i32, i32) {
    %c0_i32 = arith.constant 0 : i32
    %c0_i32_0 = arith.constant 0 : i32
    %c0_i32_1 = arith.constant 0 : i32
    return %c0_i32, %c0_i32_0 : i32, i32
  }
  func.func @transform_4(%arg0: i32) -> (i32, i32) {
    %c0_i32 = arith.constant 0 : i32
    %c0_i32_0 = arith.constant 0 : i32
    %c0_i32_1 = arith.constant 0 : i32
    return %c0_i32, %c0_i32_0 : i32, i32
  }
  func.func @transform_5(%arg0: i32) -> (i32, i32) {
    %c0_i32 = arith.constant 0 : i32
    %c0_i32_0 = arith.constant 0 : i32
    %c0_i32_1 = arith.constant 0 : i32
    return %c0_i32, %c0_i32_0 : i32, i32
  }
  func.func @transform_6(%arg0: i32) -> (i32, i32) {
    %c0_i32 = arith.constant 0 : i32
    %c0_i32_0 = arith.constant 0 : i32
    %c0_i32_1 = arith.constant 0 : i32
    return %c0_i32, %c0_i32_0 : i32, i32
  }
  func.func @transform_7(%arg0: i32) -> (i32, i32) {
    %c0_i32 = arith.constant 0 : i32
    %c0_i32_0 = arith.constant 0 : i32
    %c0_i32_1 = arith.constant 0 : i32
    return %c0_i32, %c0_i32_0 : i32, i32
  }
  func.func @transform_8(%arg0: i32) -> (i32, i32) {
    %c0_i32 = arith.constant 0 : i32
    %c0_i32_0 = arith.constant 0 : i32
    %c0_i32_1 = arith.constant 0 : i32
    return %c0_i32, %c0_i32_0 : i32, i32
  }
  func.func @transform_9(%arg0: i32) -> (i32, i32) {
    %c0_i32 = arith.constant 0 : i32
    %c0_i32_0 = arith.constant 0 : i32
    %c0_i32_1 = arith.constant 0 : i32
    return %c0_i32, %c0_i32_0 : i32, i32
  }
  func.func @transform_10(%arg0: i32) -> (i32, i32) {
    %c0_i32 = arith.constant 0 : i32
    %c0_i32_0 = arith.constant 0 : i32
    %c0_i32_1 = arith.constant 0 : i32
    return %c0_i32, %c0_i32_0 : i32, i32
  }
  func.func @transform_11(%arg0: i32) -> (i32, i32) {
    %c0_i32 = arith.constant 0 : i32
    %c0_i32_0 = arith.constant 0 : i32
    %c0_i32_1 = arith.constant 0 : i32
    return %c0_i32, %c0_i32_0 : i32, i32
  }
  func.func @transform_12(%arg0: i32) -> (i32, i32, i32) {
    %c0_i32 = arith.constant 0 : i32
    %c0_i32_0 = arith.constant 0 : i32
    %c0_i32_1 = arith.constant 0 : i32
    return %arg0, %c0_i32, %c0_i32_0 : i32, i32, i32
  }
}

</mosaic_0001>

<llo_original>
// kernel: tpu_custom_call.1
$region0: #{tpu_custom_call.1}
  #allocation0 [shape = 'u32[]', space=smem, size = 0x4, offset = 0x4, fixed_abs, tag = 'smem constant byte address 0x4 - core index']
  #allocation1 [shape = 'u32[144,128]{1,0:T(1,128)}', space=vmem, size = 0x12000, scoped, tag = 'internal scratch']
  #allocation2 [shape = 'f32[8,128]{1,0:T(8,128)}', space=vmem, size = 0x1000, scoped, tag = 'scratch operand']
  #allocation3 [shape = 'f32[8,256]{1,0:T(8,128)}', space=vmem, size = 0x2000, scoped, tag = 'scratch operand']
  %s0 = inlined_call_operand.hbm [shape: f32[2,8,128], index: 0, kind: input, shape index: {}]
  %s1 = inlined_call_operand.hbm [shape: bf16[128,768], index: 1, kind: input, shape index: {}]
  %s2 = inlined_call_operand.hbm [shape: bf16[256,128], index: 2, kind: input, shape index: {}]
  %s3 = inlined_call_operand.vmem [shape: f32[1,128], index: 3, kind: input, shape index: {}]
  %s4 = inlined_call_operand.vmem [shape: f32[1,128], index: 4, kind: input, shape index: {}]
  %s5 = inlined_call_operand.vmem [shape: f32[1,128], index: 5, kind: input, shape index: {}]
  %s6 = inlined_call_operand.hbm [shape: bf16[128,512], index: 6, kind: input, shape index: {}]
  %s7 = inlined_call_operand.vmem [shape: f32[1,512], index: 7, kind: input, shape index: {}]
  %s8 = inlined_call_operand.hbm [shape: bf16[512,128], index: 8, kind: input, shape index: {}]
  %s9 = inlined_call_operand.vmem [shape: f32[1,128], index: 9, kind: input, shape index: {}]
  %s10 = inlined_call_operand.vmem [shape: f32[1,128], index: 10, kind: input, shape index: {}]
  %s11 = inlined_call_operand.vmem [shape: f32[1,128], index: 11, kind: input, shape index: {}]
  %s12 = inlined_call_operand.hbm [shape: f32[2,8,128], index: 12, kind: output, shape index: {}]
  %s13 = sld [smem:[#allocation0]]
  $region101: #{tpu_custom_call.1} parent=0
    _
  %s15 = ssub.s32 1, %s13
  %s16 = scalar_select 0, %s15, %s13
  $region1: #{tpu_custom_call.1} parent=0
    #allocation4 [shape = 'u8[8192]{0}', space=vmem, size = 0x2000, scoped, tag = 'input window, operand 0']
    #allocation5 [shape = 's32[2]{0}', space=sflag, size = 0x8, scoped, tag = 'scoped memory for tpu_custom_call.1']
    #allocation6 [shape = 's32[2]{0}', space=sflag, size = 0x8, scoped, tag = 'scoped memory for tpu_custom_call.1']
    #allocation7 [shape = 'u8[196608]{0}', space=vmem, size = 0x30000, scoped, tag = 'input window, operand 1, single buffered']
    #allocation8 [shape = 's32[1]{0}', space=sflag, size = 0x4, scoped, tag = 'scoped memory for tpu_custom_call.1']
    #allocation9 [shape = 'u8[65536]{0}', space=vmem, size = 0x10000, scoped, tag = 'input window, operand 2, single buffered']
    #allocation10 [shape = 'u8[131072]{0}', space=vmem, size = 0x20000, scoped, tag = 'input window, operand 6, single buffered']
    #allocation11 [shape = 's32[1]{0}', space=sflag, size = 0x4, scoped, tag = 'scoped memory for tpu_custom_call.1']
    #allocation12 [shape = 'u8[131072]{0}', space=vmem, size = 0x20000, scoped, tag = 'input window, operand 8, single buffered']
    #allocation13 [shape = 'u8[8192]{0}', space=vmem, size = 0x2000, scoped, tag = 'output window, operand 0']
    %17 = vsyncpa [#allocation5], 0
    %s18 = scalar_lea.sflag [#allocation5], 1
    %19 = vsyncpa %s18, 0
    %20 = vsyncpa [#allocation8], 0
    %21 = vsyncpa [#allocation11], 0
    %22 = vsyncpa [#allocation6], 0
    %s23 = scalar_lea.sflag [#allocation6], 1
    %24 = vsyncpa %s23, 0
    loop: start=0, step=1, limit=4
    $region2: #{tpu_custom_call.1} parent=1 // loop_pre_header
      _
    $region3: #{tpu_custom_call.1} parent=1 // loop_header
      %s26 = sphi 0, %s30
      %p27 = scmp.ge.s32.totalorder %s26, 4
      %s36 = sphi 0, %s38
      %s39 = sphi 0, %s36
      %s40 = sphi 0, %s39
      %s56 = sphi 0, %s40
      %s60 = sphi 0, %s60
      %s62 = sphi 0, %s60
      %s63 = sphi 0, %s62
      %s77 = sphi 0, %s63
      %s81 = sphi 0, %s81
      %s83 = sphi 0, %s81
      %s84 = sphi 0, %s83
      %s98 = sphi 0, %s84
      %s102 = sphi 0, %s102
      %s104 = sphi 0, %s102
      %s105 = sphi 0, %s104
      %s119 = sphi 0, %s105
      %s123 = sphi 0, %s123
      %s125 = sphi 0, %s123
      %s126 = sphi 0, %s125
      %s140 = sphi 0, %s126
      %s144 = sphi 0, %s144
      %s146 = sphi 0, %s144
      %s147 = sphi 0, %s146
      %s161 = sphi 0, %s147
      %s165 = sphi 0, %s165
      %s167 = sphi 0, %s165
      %s168 = sphi 0, %s167
      %s182 = sphi 0, %s168
      %s186 = sphi 0, %s186
      %s188 = sphi 0, %s186
      %s189 = sphi 0, %s188
      %s203 = sphi 0, %s189
      %s207 = sphi 0, %s207
      %s209 = sphi 0, %s207
      %s210 = sphi 0, %s209
      %s224 = sphi 0, %s210
      %s228 = sphi 0, %s228
      %s230 = sphi 0, %s228
      %s231 = sphi 0, %s230
      %s245 = sphi 0, %s231
      %s249 = sphi 0, %s249
      %s251 = sphi 0, %s249
      %s252 = sphi 0, %s251
      %s266 = sphi 0, %s252
      %s270 = sphi 0, %s270
      %s272 = sphi 0, %s270
      %s273 = sphi 0, %s272
      %s287 = sphi 0, %s273
      %s293 = sphi 0, %s295
      %s296 = sphi 0, %s293
      %s297 = sphi 0, %s296
      %s313 = sphi 0, %s297
    $region4: #{tpu_custom_call.1} parent=1 // loop_header_branch
      %29 = sbr.rel (%p27) target = $region8
    $region5: #{tpu_custom_call.1} parent=1 // loop_body
      %s31 = ssub.s32 %s26, 1
      %s32 = ssub.s32 %s26, 2
      %s33 = sadd.s32 %s26, 1
      %s34 = ssub.s32 %s26, %s33
      %p35 = scmp.eq.s32.totalorder %s34, 0
      %s37 = sadd.s32 %s36, 1
      %s38 = scalar_select %p35, %s36, %s37
      %p41 = pneg %p35
      %p42 = scmp.eq.s32.totalorder %s26, 1
      %p43 = por %p41, %p42
      %p44 = scmp.ne.s32.totalorder %s36, %s39
      %p45 = scmp.eq.s32.totalorder %s26, 0
      %p46 = por %p44, %p45
      %p47 = scmp.ne.s32.totalorder %s36, %s39
      %p48 = scmp.eq.s32.totalorder %s31, 1
      %p49 = por %p47, %p48
      %p50 = scmp.ne.s32.totalorder %s39, %s40
      %p51 = scmp.eq.s32.totalorder %s31, 0
      %p52 = por %p50, %p51
      %p53 = scmp.ne.s32.totalorder %s39, %s40
      %p54 = scmp.eq.s32.totalorder %s32, 1
      %p55 = por %p53, %p54
      %p57 = scmp.ne.s32.totalorder %s40, %s56
      %p58 = scmp.eq.s32.totalorder %s32, 0
      %p59 = por %p57, %p58
      %s61 = sadd.s32 %s60, 1
      %p64 = scmp.eq.s32.totalorder %s26, 1
      %p65 = scmp.ne.s32.totalorder %s60, %s62
      %p66 = scmp.eq.s32.totalorder %s26, 0
      %p67 = por %p65, %p66
      %p68 = scmp.ne.s32.totalorder %s60, %s62
      %p69 = scmp.eq.s32.totalorder %s31, 1
      %p70 = por %p68, %p69
      %p71 = scmp.ne.s32.totalorder %s62, %s63
      %p72 = scmp.eq.s32.totalorder %s31, 0
      %p73 = por %p71, %p72
      %p74 = scmp.ne.s32.totalorder %s62, %s63
      %p75 = scmp.eq.s32.totalorder %s32, 1
      %p76 = por %p74, %p75
      %p78 = scmp.ne.s32.totalorder %s63, %s77
      %p79 = scmp.eq.s32.totalorder %s32, 0
      %p80 = por %p78, %p79
      %s82 = sadd.s32 %s81, 1
      %p85 = scmp.eq.s32.totalorder %s26, 1
      %p86 = scmp.ne.s32.totalorder %s81, %s83
      %p87 = scmp.eq.s32.totalorder %s26, 0
      %p88 = por %p86, %p87
      %p89 = scmp.ne.s32.totalorder %s81, %s83
      %p90 = scmp.eq.s32.totalorder %s31, 1
      %p91 = por %p89, %p90
      %p92 = scmp.ne.s32.totalorder %s83, %s84
      %p93 = scmp.eq.s32.totalorder %s31, 0
      %p94 = por %p92, %p93
      %p95 = scmp.ne.s32.totalorder %s83, %s84
      %p96 = scmp.eq.s32.totalorder %s32, 1
      %p97 = por %p95, %p96
      %p99 = scmp.ne.s32.totalorder %s84, %s98
      %p100 = scmp.eq.s32.totalorder %s32, 0
      %p101 = por %p99, %p100
      %s103 = sadd.s32 %s102, 1
      %p106 = scmp.eq.s32.totalorder %s26, 1
      %p107 = scmp.ne.s32.totalorder %s102, %s104
      %p108 = scmp.eq.s32.totalorder %s26, 0
      %p109 = por %p107, %p108
      %p110 = scmp.ne.s32.totalorder %s102, %s104
      %p111 = scmp.eq.s32.totalorder %s31, 1
      %p112 = por %p110, %p111
      %p113 = scmp.ne.s32.totalorder %s104, %s105
      %p114 = scmp.eq.s32.totalorder %s31, 0
      %p115 = por %p113, %p114
      %p116 = scmp.ne.s32.totalorder %s104, %s105
      %p117 = scmp.eq.s32.totalorder %s32, 1
      %p118 = por %p116, %p117
      %p120 = scmp.ne.s32.totalorder %s105, %s119
      %p121 = scmp.eq.s32.totalorder %s32, 0
      %p122 = por %p120, %p121
      %s124 = sadd.s32 %s123, 1
      %p127 = scmp.eq.s32.totalorder %s26, 1
      %p128 = scmp.ne.s32.totalorder %s123, %s125
      %p129 = scmp.eq.s32.totalorder %s26, 0
      %p130 = por %p128, %p129
      %p131 = scmp.ne.s32.totalorder %s123, %s125
      %p132 = scmp.eq.s32.totalorder %s31, 1
      %p133 = por %p131, %p132
      %p134 = scmp.ne.s32.totalorder %s125, %s126
      %p135 = scmp.eq.s32.totalorder %s31, 0
      %p136 = por %p134, %p135
      %p137 = scmp.ne.s32.totalorder %s125, %s126
      %p138 = scmp.eq.s32.totalorder %s32, 1
      %p139 = por %p137, %p138
      %p141 = scmp.ne.s32.totalorder %s126, %s140
      %p142 = scmp.eq.s32.totalorder %s32, 0
      %p143 = por %p141, %p142
      %s145 = sadd.s32 %s144, 1
      %p148 = scmp.eq.s32.totalorder %s26, 1
      %p149 = scmp.ne.s32.totalorder %s144, %s146
      %p150 = scmp.eq.s32.totalorder %s26, 0
      %p151 = por %p149, %p150
      %p152 = scmp.ne.s32.totalorder %s144, %s146
      %p153 = scmp.eq.s32.totalorder %s31, 1
      %p154 = por %p152, %p153
      %p155 = scmp.ne.s32.totalorder %s146, %s147
      %p156 = scmp.eq.s32.totalorder %s31, 0
      %p157 = por %p155, %p156
      %p158 = scmp.ne.s32.totalorder %s146, %s147
      %p159 = scmp.eq.s32.totalorder %s32, 1
      %p160 = por %p158, %p159
      %p162 = scmp.ne.s32.totalorder %s147, %s161
      %p163 = scmp.eq.s32.totalorder %s32, 0
      %p164 = por %p162, %p163
      %s166 = sadd.s32 %s165, 1
      %p169 = scmp.eq.s32.totalorder %s26, 1
      %p170 = scmp.ne.s32.totalorder %s165, %s167
      %p171 = scmp.eq.s32.totalorder %s26, 0
      %p172 = por %p170, %p171
      %p173 = scmp.ne.s32.totalorder %s165, %s167
      %p174 = scmp.eq.s32.totalorder %s31, 1
      %p175 = por %p173, %p174
      %p176 = scmp.ne.s32.totalorder %s167, %s168
      %p177 = scmp.eq.s32.totalorder %s31, 0
      %p178 = por %p176, %p177
      %p179 = scmp.ne.s32.totalorder %s167, %s168
      %p180 = scmp.eq.s32.totalorder %s32, 1
      %p181 = por %p179, %p180
      %p183 = scmp.ne.s32.totalorder %s168, %s182
      %p184 = scmp.eq.s32.totalorder %s32, 0
      %p185 = por %p183, %p184
      %s187 = sadd.s32 %s186, 1
      %p190 = scmp.eq.s32.totalorder %s26, 1
      %p191 = scmp.ne.s32.totalorder %s186, %s188
      %p192 = scmp.eq.s32.totalorder %s26, 0
      %p193 = por %p191, %p192
      %p194 = scmp.ne.s32.totalorder %s186, %s188
      %p195 = scmp.eq.s32.totalorder %s31, 1
      %p196 = por %p194, %p195
      %p197 = scmp.ne.s32.totalorder %s188, %s189
      %p198 = scmp.eq.s32.totalorder %s31, 0
      %p199 = por %p197, %p198
      %p200 = scmp.ne.s32.totalorder %s188, %s189
      %p201 = scmp.eq.s32.totalorder %s32, 1
      %p202 = por %p200, %p201
      %p204 = scmp.ne.s32.totalorder %s189, %s203
      %p205 = scmp.eq.s32.totalorder %s32, 0
      %p206 = por %p204, %p205
      %s208 = sadd.s32 %s207, 1
      %p211 = scmp.eq.s32.totalorder %s26, 1
      %p212 = scmp.ne.s32.totalorder %s207, %s209
      %p213 = scmp.eq.s32.totalorder %s26, 0
      %p214 = por %p212, %p213
      %p215 = scmp.ne.s32.totalorder %s207, %s209
      %p216 = scmp.eq.s32.totalorder %s31, 1
      %p217 = por %p215, %p216
      %p218 = scmp.ne.s32.totalorder %s209, %s210
      %p219 = scmp.eq.s32.totalorder %s31, 0
      %p220 = por %p218, %p219
      %p221 = scmp.ne.s32.totalorder %s209, %s210
      %p222 = scmp.eq.s32.totalorder %s32, 1
      %p223 = por %p221, %p222
      %p225 = scmp.ne.s32.totalorder %s210, %s224
      %p226 = scmp.eq.s32.totalorder %s32, 0
      %p227 = por %p225, %p226
      %s229 = sadd.s32 %s228, 1
      %p232 = scmp.eq.s32.totalorder %s26, 1
      %p233 = scmp.ne.s32.totalorder %s228, %s230
      %p234 = scmp.eq.s32.totalorder %s26, 0
      %p235 = por %p233, %p234
      %p236 = scmp.ne.s32.totalorder %s228, %s230
      %p237 = scmp.eq.s32.totalorder %s31, 1
      %p238 = por %p236, %p237
      %p239 = scmp.ne.s32.totalorder %s230, %s231
      %p240 = scmp.eq.s32.totalorder %s31, 0
      %p241 = por %p239, %p240
      %p242 = scmp.ne.s32.totalorder %s230, %s231
      %p243 = scmp.eq.s32.totalorder %s32, 1
      %p244 = por %p242, %p243
      %p246 = scmp.ne.s32.totalorder %s231, %s245
      %p247 = scmp.eq.s32.totalorder %s32, 0
      %p248 = por %p246, %p247
      %s250 = sadd.s32 %s249, 1
      %p253 = scmp.eq.s32.totalorder %s26, 1
      %p254 = scmp.ne.s32.totalorder %s249, %s251
      %p255 = scmp.eq.s32.totalorder %s26, 0
      %p256 = por %p254, %p255
      %p257 = scmp.ne.s32.totalorder %s249, %s251
      %p258 = scmp.eq.s32.totalorder %s31, 1
      %p259 = por %p257, %p258
      %p260 = scmp.ne.s32.totalorder %s251, %s252
      %p261 = scmp.eq.s32.totalorder %s31, 0
      %p262 = por %p260, %p261
      %p263 = scmp.ne.s32.totalorder %s251, %s252
      %p264 = scmp.eq.s32.totalorder %s32, 1
      %p265 = por %p263, %p264
      %p267 = scmp.ne.s32.totalorder %s252, %s266
      %p268 = scmp.eq.s32.totalorder %s32, 0
      %p269 = por %p267, %p268
      %s271 = sadd.s32 %s270, 1
      %p274 = scmp.eq.s32.totalorder %s26, 1
      %p275 = scmp.ne.s32.totalorder %s270, %s272
      %p276 = scmp.eq.s32.totalorder %s26, 0
      %p277 = por %p275, %p276
      %p278 = scmp.ne.s32.totalorder %s270, %s272
      %p279 = scmp.eq.s32.totalorder %s31, 1
      %p280 = por %p278, %p279
      %p281 = scmp.ne.s32.totalorder %s272, %s273
      %p282 = scmp.eq.s32.totalorder %s31, 0
      %p283 = por %p281, %p282
      %p284 = scmp.ne.s32.totalorder %s272, %s273
      %p285 = scmp.eq.s32.totalorder %s32, 1
      %p286 = por %p284, %p285
      %p288 = scmp.ne.s32.totalorder %s273, %s287
      %p289 = scmp.eq.s32.totalorder %s32, 0
      %p290 = por %p288, %p289
      %s291 = ssub.s32 %s26, %s33
      %p292 = scmp.eq.s32.totalorder %s291, 0
      %s294 = sadd.s32 %s293, 1
      %s295 = scalar_select %p292, %s293, %s294
      %p298 = pneg %p292
      %p299 = scmp.eq.s32.totalorder %s26, 1
      %p300 = por %p298, %p299
      %p301 = scmp.ne.s32.totalorder %s293, %s296
      %p302 = scmp.eq.s32.totalorder %s26, 0
      %p303 = por %p301, %p302
      %p304 = scmp.ne.s32.totalorder %s293, %s296
      %p305 = scmp.eq.s32.totalorder %s31, 1
      %p306 = por %p304, %p305
      %p307 = scmp.ne.s32.totalorder %s296, %s297
      %p308 = scmp.eq.s32.totalorder %s31, 0
      %p309 = por %p307, %p308
      %p310 = scmp.ne.s32.totalorder %s296, %s297
      %p311 = scmp.eq.s32.totalorder %s32, 1
      %p312 = por %p310, %p311
      %p314 = scmp.ne.s32.totalorder %s297, %s313
      %p315 = scmp.eq.s32.totalorder %s32, 0
      %p316 = por %p314, %p315
      %p317 = scmp.le.s32.totalorder 1, %s26
      %p318 = scmp.lt.s32.totalorder %s26, 3
      %p319 = pnand %p317, %p318
      %p320 = pneg %p319
      // Predicated region
      $region9: #{tpu_custom_call.1} parent=5 // pred_check
        _
      $region10: #{tpu_custom_call.1} parent=5 // pred_check_branch
        %322 = sbr.rel (%p319) target = $region12
      $region11: #{tpu_custom_call.1} parent=5 // pred_region
        %s323 = ssub.s32 %s26, 1
        // Predicated region
        $region13: #{tpu_custom_call.1} parent=11 // pred_check
          %p324 = pneg %p73
        $region14: #{tpu_custom_call.1} parent=11 // pred_check_branch
          %326 = sbr.rel (%p324) target = $region16
        $region15: #{tpu_custom_call.1} parent=11 // pred_region
          %s328 = ssub.s32 6144, 6144
          %329 = vsyncadd [#allocation8], %s328
          %s330 = sshll.u32 [#allocation7], 4
          %s331 = int_to_ptr.vmem [resolvable:$true] %s330
          %336 = dma.hbm_to_vmem [thread:$0]  %s1, 6144, %s331, [#allocation8], 384, 384, 24
        $region16: #{tpu_custom_call.1} parent=11 // pred_fallthru
          _
        // Predicated region
        $region17: #{tpu_custom_call.1} parent=11 // pred_check
          %p337 = pneg %p94
        $region18: #{tpu_custom_call.1} parent=11 // pred_check_branch
          %339 = sbr.rel (%p337) target = $region20
        $region19: #{tpu_custom_call.1} parent=11 // pred_region
          %s341 = ssub.s32 2048, 2048
          %342 = vsyncadd [#allocation8], %s341
          %s343 = sshll.u32 [#allocation9], 4
          %s344 = int_to_ptr.vmem [resolvable:$true] %s343
          %349 = dma.hbm_to_vmem [thread:$0]  %s2, 2048, %s344, [#allocation8], 64, 64, 4
        $region20: #{tpu_custom_call.1} parent=11 // pred_fallthru
          _
        // Predicated region
        $region21: #{tpu_custom_call.1} parent=11 // pred_check
          %p350 = pneg %p115
        $region22: #{tpu_custom_call.1} parent=11 // pred_check_branch
          %352 = sbr.rel (%p350) target = $region24
        $region23: #{tpu_custom_call.1} parent=11 // pred_region
          _
        $region24: #{tpu_custom_call.1} parent=11 // pred_fallthru
          _
        // Predicated region
        $region25: #{tpu_custom_call.1} parent=11 // pred_check
          %p353 = pneg %p136
        $region26: #{tpu_custom_call.1} parent=11 // pred_check_branch
          %355 = sbr.rel (%p353) target = $region28
        $region27: #{tpu_custom_call.1} parent=11 // pred_region
          _
        $region28: #{tpu_custom_call.1} parent=11 // pred_fallthru
          _
        // Predicated region
        $region29: #{tpu_custom_call.1} parent=11 // pred_check
          %p356 = pneg %p157
        $region30: #{tpu_custom_call.1} parent=11 // pred_check_branch
          %358 = sbr.rel (%p356) target = $region32
        $region31: #{tpu_custom_call.1} parent=11 // pred_region
          _
        $region32: #{tpu_custom_call.1} parent=11 // pred_fallthru
          _
        // Predicated region
        $region33: #{tpu_custom_call.1} parent=11 // pred_check
          %p359 = pneg %p178
        $region34: #{tpu_custom_call.1} parent=11 // pred_check_branch
          %361 = sbr.rel (%p359) target = $region36
        $region35: #{tpu_custom_call.1} parent=11 // pred_region
          %s363 = ssub.s32 4096, 4096
          %364 = vsyncadd [#allocation11], %s363
          %s365 = sshll.u32 [#allocation10], 4
          %s366 = int_to_ptr.vmem [resolvable:$true] %s365
          %371 = dma.hbm_to_vmem [thread:$0]  %s6, 4096, %s366, [#allocation11], 256, 256, 16
        $region36: #{tpu_custom_call.1} parent=11 // pred_fallthru
          _
        // Predicated region
        $region37: #{tpu_custom_call.1} parent=11 // pred_check
          %p372 = pneg %p199
        $region38: #{tpu_custom_call.1} parent=11 // pred_check_branch
          %374 = sbr.rel (%p372) target = $region40
        $region39: #{tpu_custom_call.1} parent=11 // pred_region
          _
        $region40: #{tpu_custom_call.1} parent=11 // pred_fallthru
          _
        // Predicated region
        $region41: #{tpu_custom_call.1} parent=11 // pred_check
          %p375 = pneg %p220
        $region42: #{tpu_custom_call.1} parent=11 // pred_check_branch
          %377 = sbr.rel (%p375) target = $region44
        $region43: #{tpu_custom_call.1} parent=11 // pred_region
          %s379 = ssub.s32 4096, 4096
          %380 = vsyncadd [#allocation11], %s379
          %s381 = sshll.u32 [#allocation12], 4
          %s382 = int_to_ptr.vmem [resolvable:$true] %s381
          %387 = dma.hbm_to_vmem [thread:$0]  %s8, 4096, %s382, [#allocation11], 64, 64, 4
        $region44: #{tpu_custom_call.1} parent=11 // pred_fallthru
          _
        // Predicated region
        $region45: #{tpu_custom_call.1} parent=11 // pred_check
          %p388 = pneg %p241
        $region46: #{tpu_custom_call.1} parent=11 // pred_check_branch
          %390 = sbr.rel (%p388) target = $region48
        $region47: #{tpu_custom_call.1} parent=11 // pred_region
          _
        $region48: #{tpu_custom_call.1} parent=11 // pred_fallthru
          _
        // Predicated region
        $region49: #{tpu_custom_call.1} parent=11 // pred_check
          %p391 = pneg %p262
        $region50: #{tpu_custom_call.1} parent=11 // pred_check_branch
          %393 = sbr.rel (%p391) target = $region52
        $region51: #{tpu_custom_call.1} parent=11 // pred_region
          _
        $region52: #{tpu_custom_call.1} parent=11 // pred_fallthru
          _
        // Predicated region
        $region53: #{tpu_custom_call.1} parent=11 // pred_check
          %p394 = pneg %p283
        $region54: #{tpu_custom_call.1} parent=11 // pred_check_branch
          %396 = sbr.rel (%p394) target = $region56
        $region55: #{tpu_custom_call.1} parent=11 // pred_region
          _
        $region56: #{tpu_custom_call.1} parent=11 // pred_fallthru
          _
      $region12: #{tpu_custom_call.1} parent=5 // pred_fallthru
        _
      %p397 = scmp.lt.s32.totalorder %s26, 2
      // Predicated region
      $region57: #{tpu_custom_call.1} parent=5 // pred_check
        %p398 = pneg %p397
      $region58: #{tpu_custom_call.1} parent=5 // pred_check_branch
        %400 = sbr.rel (%p398) target = $region60
      $region59: #{tpu_custom_call.1} parent=5 // pred_region
        // Predicated region
        $region61: #{tpu_custom_call.1} parent=59 // pred_check
          %p401 = pneg %p46
        $region62: #{tpu_custom_call.1} parent=59 // pred_check_branch
          %403 = sbr.rel (%p401) target = $region64
        $region63: #{tpu_custom_call.1} parent=59 // pred_region
          %s404 = sand.u32 %s36, 1
          %s405 = scalar_lea.sflag [#allocation5], %s404
          %s406 = sand.u32 %s36, 1
          %s407 = smul.addr %s406, 8
          %s408 = scalar_lea.vmem [#allocation4], %s407
          %s410 = ssub.s32 128, 128
          %411 = vsyncadd %s405, %s410
          %s412 = smul.addr %s26, 128
          %s413 = scalar_lea.hbm %s0, %s412
          %s415 = sshll.u32 %s408, 4
          %s416 = int_to_ptr.vmem [resolvable:$true] %s415
          %418 = dma.hbm_to_vmem [thread:$0]  %s413, 128, %s416, %s405
        $region64: #{tpu_custom_call.1} parent=59 // pred_fallthru
          _
      $region60: #{tpu_custom_call.1} parent=5 // pred_fallthru
        _
      %p419 = scmp.le.s32.totalorder 1, %s26
      %p420 = scmp.lt.s32.totalorder %s26, 3
      %p421 = pnand %p419, %p420
      %p422 = pneg %p421
      // Predicated region
      $region65: #{tpu_custom_call.1} parent=5 // pred_check
        _
      $region66: #{tpu_custom_call.1} parent=5 // pred_check_branch
        %424 = sbr.rel (%p421) target = $region68
      $region67: #{tpu_custom_call.1} parent=5 // pred_region
        %s425 = ssub.s32 %s26, 1
        %s426 = sand.u32 %s39, 1
        %s427 = scalar_lea.sflag [#allocation5], %s426
        %s428 = sand.u32 %s39, 1
        %s429 = smul.addr %s428, 8
        %s430 = scalar_lea.vmem [#allocation4], %s429
        // Predicated region
        $region69: #{tpu_custom_call.1} parent=67 // pred_check
          %p431 = pneg %p52
        $region70: #{tpu_custom_call.1} parent=67 // pred_check_branch
          %433 = sbr.rel (%p431) target = $region72
        $region71: #{tpu_custom_call.1} parent=67 // pred_region
          %434 = dma.done %s427, 128
        $region72: #{tpu_custom_call.1} parent=67 // pred_fallthru
          _
        // Predicated region
        $region73: #{tpu_custom_call.1} parent=67 // pred_check
          %p435 = pneg %p73
        $region74: #{tpu_custom_call.1} parent=67 // pred_check_branch
          %437 = sbr.rel (%p435) target = $region76
        $region75: #{tpu_custom_call.1} parent=67 // pred_region
          %438 = dma.done [#allocation8], 6144
        $region76: #{tpu_custom_call.1} parent=67 // pred_fallthru
          _
        // Predicated region
        $region77: #{tpu_custom_call.1} parent=67 // pred_check
          %p439 = pneg %p94
        $region78: #{tpu_custom_call.1} parent=67 // pred_check_branch
          %441 = sbr.rel (%p439) target = $region80
        $region79: #{tpu_custom_call.1} parent=67 // pred_region
          %442 = dma.done [#allocation8], 2048
        $region80: #{tpu_custom_call.1} parent=67 // pred_fallthru
          _
        // Predicated region
        $region81: #{tpu_custom_call.1} parent=67 // pred_check
          %p443 = pneg %p178
        $region82: #{tpu_custom_call.1} parent=67 // pred_check_branch
          %445 = sbr.rel (%p443) target = $region84
        $region83: #{tpu_custom_call.1} parent=67 // pred_region
          %446 = dma.done [#allocation11], 4096
        $region84: #{tpu_custom_call.1} parent=67 // pred_fallthru
          _
        // Predicated region
        $region85: #{tpu_custom_call.1} parent=67 // pred_check
          %p447 = pneg %p220
        $region86: #{tpu_custom_call.1} parent=67 // pred_check_branch
          %449 = sbr.rel (%p447) target = $region88
        $region87: #{tpu_custom_call.1} parent=67 // pred_region
          %450 = dma.done [#allocation11], 4096
        $region88: #{tpu_custom_call.1} parent=67 // pred_fallthru
          _
        %s451 = sand.u32 %s39, 1
        %s452 = scalar_lea.sflag [#allocation5], %s451
        %s453 = sand.u32 %s39, 1
        %s454 = smul.addr %s453, 8
        %s455 = scalar_lea.vmem [#allocation4], %s454
        %p456 = pneg %p52
        %p457 = pneg %p49
        %p458 = pneg %p73
        %p459 = pneg %p70
        %p460 = pneg %p94
        %p461 = pneg %p91
        %p462 = pneg %p115
        %p463 = pneg %p112
        %p464 = pneg %p136
        %p465 = pneg %p133
        %p466 = pneg %p157
        %p467 = pneg %p154
        %p468 = pneg %p178
        %p469 = pneg %p175
        %p470 = pneg %p199
        %p471 = pneg %p196
        %p472 = pneg %p220
        %p473 = pneg %p217
        %p474 = pneg %p241
        %p475 = pneg %p238
        %p476 = pneg %p262
        %p477 = pneg %p259
        %p478 = pneg %p283
        %p479 = pneg %p280
        %p480 = pneg %p309
        %p481 = pneg %p306
        %s482 = sand.u32 %s296, 1
        %s483 = scalar_lea.sflag [#allocation6], %s482
        %s484 = sand.u32 %s296, 1
        %s485 = smul.addr %s484, 8
        %s486 = scalar_lea.vmem [#allocation13], %s485
        %v488 = vld [vmem:[%s430] sm:$0xff]
        %v489 = vpack.c.bf16 %v488, %v488
        %v490 = vld [vmem:[#allocation7] sm:$0xff]
        %v491 = vld [vmem:[#allocation7 + $0x8] sm:$0xff]
        %v492 = vld [vmem:[#allocation7 + $0x10] sm:$0xff]
        %v493 = vld [vmem:[#allocation7 + $0x18] sm:$0xff]
        %v494 = vld [vmem:[#allocation7 + $0x20] sm:$0xff]
        %v495 = vld [vmem:[#allocation7 + $0x28] sm:$0xff]
        %v496 = vld [vmem:[#allocation7 + $0x30] sm:$0xff]
        %v497 = vld [vmem:[#allocation7 + $0x38] sm:$0xff]
        %v498 = vld [vmem:[#allocation7 + $0x40] sm:$0xff]
        %v499 = vld [vmem:[#allocation7 + $0x48] sm:$0xff]
        %v500 = vld [vmem:[#allocation7 + $0x50] sm:$0xff]
        %v501 = vld [vmem:[#allocation7 + $0x58] sm:$0xff]
        %v502 = vld [vmem:[#allocation7 + $0x60] sm:$0xff]
        %v503 = vld [vmem:[#allocation7 + $0x68] sm:$0xff]
        %v504 = vld [vmem:[#allocation7 + $0x70] sm:$0xff]
        %v505 = vld [vmem:[#allocation7 + $0x78] sm:$0xff]
        %v506 = vld [vmem:[#allocation7 + $0x80] sm:$0xff]
        %v507 = vld [vmem:[#allocation7 + $0x88] sm:$0xff]
        %v508 = vld [vmem:[#allocation7 + $0x90] sm:$0xff]
        %v509 = vld [vmem:[#allocation7 + $0x98] sm:$0xff]
        %v510 = vld [vmem:[#allocation7 + $0xa0] sm:$0xff]
        %v511 = vld [vmem:[#allocation7 + $0xa8] sm:$0xff]
        %v512 = vld [vmem:[#allocation7 + $0xb0] sm:$0xff]
        %v513 = vld [vmem:[#allocation7 + $0xb8] sm:$0xff]
        %v514 = vld [vmem:[#allocation7 + $0xc0] sm:$0xff]
        %v515 = vld [vmem:[#allocation7 + $0xc8] sm:$0xff]
        %v516 = vld [vmem:[#allocation7 + $0xd0] sm:$0xff]
        %v517 = vld [vmem:[#allocation7 + $0xd8] sm:$0xff]
        %v518 = vld [vmem:[#allocation7 + $0xe0] sm:$0xff]
        %v519 = vld [vmem:[#allocation7 + $0xe8] sm:$0xff]
        %v520 = vld [vmem:[#allocation7 + $0xf0] sm:$0xff]
        %v521 = vld [vmem:[#allocation7 + $0xf8] sm:$0xff]
        %v522 = vld [vmem:[#allocation7 + $0x100] sm:$0xff]
        %v523 = vld [vmem:[#allocation7 + $0x108] sm:$0xff]
        %v524 = vld [vmem:[#allocation7 + $0x110] sm:$0xff]
        %v525 = vld [vmem:[#allocation7 + $0x118] sm:$0xff]
        %v526 = vld [vmem:[#allocation7 + $0x120] sm:$0xff]
        %v527 = vld [vmem:[#allocation7 + $0x128] sm:$0xff]
        %v528 = vld [vmem:[#allocation7 + $0x130] sm:$0xff]
        %v529 = vld [vmem:[#allocation7 + $0x138] sm:$0xff]
        %v530 = vld [vmem:[#allocation7 + $0x140] sm:$0xff]
        %v531 = vld [vmem:[#allocation7 + $0x148] sm:$0xff]
        %v532 = vld [vmem:[#allocation7 + $0x150] sm:$0xff]
        %v533 = vld [vmem:[#allocation7 + $0x158] sm:$0xff]
        %v534 = vld [vmem:[#allocation7 + $0x160] sm:$0xff]
        %v535 = vld [vmem:[#allocation7 + $0x168] sm:$0xff]
        %v536 = vld [vmem:[#allocation7 + $0x170] sm:$0xff]
        %v537 = vld [vmem:[#allocation7 + $0x178] sm:$0xff]
        %v586 = vunpack.c.l.b16 %v490
        %v587 = vunpack.c.h.b16 %v490
        %v588 = vunpack.c.l.b16 %v491
        %v589 = vunpack.c.h.b16 %v491
        %v590 = vunpack.c.l.b16 %v492
        %v591 = vunpack.c.h.b16 %v492
        %v592 = vunpack.c.l.b16 %v493
        %v593 = vunpack.c.h.b16 %v493
        %v594 = vunpack.c.l.b16 %v494
        %v595 = vunpack.c.h.b16 %v494
        %v596 = vunpack.c.l.b16 %v495
        %v597 = vunpack.c.h.b16 %v495
        %v598 = vunpack.c.l.b16 %v496
        %v599 = vunpack.c.h.b16 %v496
        %v600 = vunpack.c.l.b16 %v497
        %v601 = vunpack.c.h.b16 %v497
        %v602 = vunpack.c.l.b16 %v498
        %v603 = vunpack.c.h.b16 %v498
        %v604 = vunpack.c.l.b16 %v499
        %v605 = vunpack.c.h.b16 %v499
        %v606 = vunpack.c.l.b16 %v500
        %v607 = vunpack.c.h.b16 %v500
        %v608 = vunpack.c.l.b16 %v501
        %v609 = vunpack.c.h.b16 %v501
        %v610 = vunpack.c.l.b16 %v502
        %v611 = vunpack.c.h.b16 %v502
        %v612 = vunpack.c.l.b16 %v503
        %v613 = vunpack.c.h.b16 %v503
        %v614 = vunpack.c.l.b16 %v504
        %v615 = vunpack.c.h.b16 %v504
        %v616 = vunpack.c.l.b16 %v505
        %v617 = vunpack.c.h.b16 %v505
        %v618 = vunpack.c.l.b16 %v506
        %v619 = vunpack.c.h.b16 %v506
        %v620 = vunpack.c.l.b16 %v507
        %v621 = vunpack.c.h.b16 %v507
        %v622 = vunpack.c.l.b16 %v508
        %v623 = vunpack.c.h.b16 %v508
        %v624 = vunpack.c.l.b16 %v509
        %v625 = vunpack.c.h.b16 %v509
        %v626 = vunpack.c.l.b16 %v510
        %v627 = vunpack.c.h.b16 %v510
        %v628 = vunpack.c.l.b16 %v511
        %v629 = vunpack.c.h.b16 %v511
        %v630 = vunpack.c.l.b16 %v512
        %v631 = vunpack.c.h.b16 %v512
        %v632 = vunpack.c.l.b16 %v513
        %v633 = vunpack.c.h.b16 %v513
        %v634 = vunpack.c.l.b16 %v514
        %v635 = vunpack.c.h.b16 %v514
        %v636 = vunpack.c.l.b16 %v515
        %v637 = vunpack.c.h.b16 %v515
        %v638 = vunpack.c.l.b16 %v516
        %v639 = vunpack.c.h.b16 %v516
        %v640 = vunpack.c.l.b16 %v517
        %v641 = vunpack.c.h.b16 %v517
        %v642 = vunpack.c.l.b16 %v518
        %v643 = vunpack.c.h.b16 %v518
        %v644 = vunpack.c.l.b16 %v519
        %v645 = vunpack.c.h.b16 %v519
        %v646 = vunpack.c.l.b16 %v520
        %v647 = vunpack.c.h.b16 %v520
        %v648 = vunpack.c.l.b16 %v521
        %v649 = vunpack.c.h.b16 %v521
        %v650 = vunpack.c.l.b16 %v522
        %v651 = vunpack.c.h.b16 %v522
        %v652 = vunpack.c.l.b16 %v523
        %v653 = vunpack.c.h.b16 %v523
        %v654 = vunpack.c.l.b16 %v524
        %v655 = vunpack.c.h.b16 %v524
        %v656 = vunpack.c.l.b16 %v525
        %v657 = vunpack.c.h.b16 %v525
        %v658 = vunpack.c.l.b16 %v526
        %v659 = vunpack.c.h.b16 %v526
        %v660 = vunpack.c.l.b16 %v527
        %v661 = vunpack.c.h.b16 %v527
        %v662 = vunpack.c.l.b16 %v528
        %v663 = vunpack.c.h.b16 %v528
        %v664 = vunpack.c.l.b16 %v529
        %v665 = vunpack.c.h.b16 %v529
        %v666 = vunpack.c.l.b16 %v530
        %v667 = vunpack.c.h.b16 %v530
        %v668 = vunpack.c.l.b16 %v531
        %v669 = vunpack.c.h.b16 %v531
        %v670 = vunpack.c.l.b16 %v532
        %v671 = vunpack.c.h.b16 %v532
        %v672 = vunpack.c.l.b16 %v533
        %v673 = vunpack.c.h.b16 %v533
        %v674 = vunpack.c.l.b16 %v534
        %v675 = vunpack.c.h.b16 %v534
        %v676 = vunpack.c.l.b16 %v535
        %v677 = vunpack.c.h.b16 %v535
        %v678 = vunpack.c.l.b16 %v536
        %v679 = vunpack.c.h.b16 %v536
        %v680 = vunpack.c.l.b16 %v537
        %v681 = vunpack.c.h.b16 %v537
        %v682 = vpack.c.b16 %v592, %v586
        %v683 = vpack.c.b16 %v593, %v587
        %v684 = vpack.c.b16 %v594, %v588
        %v685 = vpack.c.b16 %v595, %v589
        %v686 = vpack.c.b16 %v596, %v590
        %v687 = vpack.c.b16 %v597, %v591
        %v688 = vpack.c.b16 %v604, %v598
        %v689 = vpack.c.b16 %v605, %v599
        %v690 = vpack.c.b16 %v606, %v600
        %v691 = vpack.c.b16 %v607, %v601
        %v692 = vpack.c.b16 %v608, %v602
        %v693 = vpack.c.b16 %v609, %v603
        %v694 = vpack.c.b16 %v616, %v610
        %v695 = vpack.c.b16 %v617, %v611
        %v696 = vpack.c.b16 %v618, %v612
        %v697 = vpack.c.b16 %v619, %v613
        %v698 = vpack.c.b16 %v620, %v614
        %v699 = vpack.c.b16 %v621, %v615
        %v700 = vpack.c.b16 %v628, %v622
        %v701 = vpack.c.b16 %v629, %v623
        %v702 = vpack.c.b16 %v630, %v624
        %v703 = vpack.c.b16 %v631, %v625
        %v704 = vpack.c.b16 %v632, %v626
        %v705 = vpack.c.b16 %v633, %v627
        %v706 = vpack.c.b16 %v640, %v634
        %v707 = vpack.c.b16 %v641, %v635
        %v708 = vpack.c.b16 %v642, %v636
        %v709 = vpack.c.b16 %v643, %v637
        %v710 = vpack.c.b16 %v644, %v638
        %v711 = vpack.c.b16 %v645, %v639
        %v712 = vpack.c.b16 %v652, %v646
        %v713 = vpack.c.b16 %v653, %v647
        %v714 = vpack.c.b16 %v654, %v648
        %v715 = vpack.c.b16 %v655, %v649
        %v716 = vpack.c.b16 %v656, %v650
        %v717 = vpack.c.b16 %v657, %v651
        %v718 = vpack.c.b16 %v664, %v658
        %v719 = vpack.c.b16 %v665, %v659
        %v720 = vpack.c.b16 %v666, %v660
        %v721 = vpack.c.b16 %v667, %v661
        %v722 = vpack.c.b16 %v668, %v662
        %v723 = vpack.c.b16 %v669, %v663
        %v724 = vpack.c.b16 %v676, %v670
        %v725 = vpack.c.b16 %v677, %v671
        %v726 = vpack.c.b16 %v678, %v672
        %v727 = vpack.c.b16 %v679, %v673
        %v728 = vpack.c.b16 %v680, %v674
        %v729 = vpack.c.b16 %v681, %v675
        %778 = vmatprep.subr.bf16.mxu0 %v725
        %779 = vmatpush1.bf16.msra.mxu0 %v724
        %780 = vmatprep.subr.bf16.mxu0 %v719
        %781 = vmatpush1.bf16.msra.mxu0 %v718
        %782 = vmatprep.subr.bf16.mxu0 %v713
        %783 = vmatpush1.bf16.msra.mxu0 %v712
        %784 = vmatprep.subr.bf16.mxu0 %v707
        %785 = vmatpush1.bf16.msra.mxu0 %v706
        %786 = vmatprep.subr.bf16.mxu0 %v701
        %787 = vmatpush1.bf16.msra.mxu0 %v700
        %788 = vmatprep.subr.bf16.mxu0 %v695
        %789 = vmatpush1.bf16.msra.mxu0 %v694
        %790 = vmatprep.subr.bf16.mxu0 %v689
        %791 = vmatpush1.bf16.msra.mxu0 %v688
        %792 = vmatprep.subr.bf16.mxu0 %v683
        %793 = vmatpush1.bf16.msra.mxu0 %v682
        %794 = vmatprep.subr.bf16.mxu0 0
        %795 = vmatpush2.bf16.msra.mxu0 0
        %796 = vmatprep.subr.bf16.mxu0 0
        %797 = vmatpush2.bf16.msra.mxu0 0
        %798 = vmatprep.subr.bf16.mxu0 0
        %799 = vmatpush2.bf16.msra.mxu0 0
        %800 = vmatprep.subr.bf16.mxu0 0
        %801 = vmatpush2.bf16.msra.mxu0 0
        %802 = vmatprep.subr.bf16.mxu0 0
        %803 = vmatpush2.bf16.msra.mxu0 0
        %804 = vmatprep.subr.bf16.mxu0 0
        %805 = vmatpush2.bf16.msra.mxu0 0
        %806 = vmatprep.subr.bf16.mxu0 0
        %807 = vmatpush2.bf16.msra.mxu0 0
        %808 = vmatprep.subr.bf16.mxu0 0
        %809 = vmatpush2.bf16.msra.mxu0 0
        %810 = vmatprep.mubr.bf16.mxu0 0
        %811 = vmatmul.mubr.bf16.gmra.mxu0 %v489
        %v812 = vpop.f32.mrf.mxu0
        %v813 = vadd.f32 0.0, %v812
        %v814 = vpop.f32.mrf.mxu0
        %v815 = vadd.f32 0.0, %v814
        %v816 = vpop.f32.mrf.mxu0
        %v817 = vpop.f32.mrf.mxu0
        %818 = vdwg.mxu0
        %819 = vmatprep.subr.bf16.mxu0 %v727
        %820 = vmatpush1.bf16.msra.mxu0 %v726
        %821 = vmatprep.subr.bf16.mxu0 %v721
        %822 = vmatpush1.bf16.msra.mxu0 %v720
        %823 = vmatprep.subr.bf16.mxu0 %v715
        %824 = vmatpush1.bf16.msra.mxu0 %v714
        %825 = vmatprep.subr.bf16.mxu0 %v709
        %826 = vmatpush1.bf16.msra.mxu0 %v708
        %827 = vmatprep.subr.bf16.mxu0 %v703
        %828 = vmatpush1.bf16.msra.mxu0 %v702
        %829 = vmatprep.subr.bf16.mxu0 %v697
        %830 = vmatpush1.bf16.msra.mxu0 %v696
        %831 = vmatprep.subr.bf16.mxu0 %v691
        %832 = vmatpush1.bf16.msra.mxu0 %v690
        %833 = vmatprep.subr.bf16.mxu0 %v685
        %834 = vmatpush1.bf16.msra.mxu0 %v684
        %835 = vmatprep.subr.bf16.mxu0 0
        %836 = vmatpush2.bf16.msra.mxu0 0
        %837 = vmatprep.subr.bf16.mxu0 0
        %838 = vmatpush2.bf16.msra.mxu0 0
        %839 = vmatprep.subr.bf16.mxu0 0
        %840 = vmatpush2.bf16.msra.mxu0 0
        %841 = vmatprep.subr.bf16.mxu0 0
        %842 = vmatpush2.bf16.msra.mxu0 0
        %843 = vmatprep.subr.bf16.mxu0 0
        %844 = vmatpush2.bf16.msra.mxu0 0
        %845 = vmatprep.subr.bf16.mxu0 0
        %846 = vmatpush2.bf16.msra.mxu0 0
        %847 = vmatprep.subr.bf16.mxu0 0
        %848 = vmatpush2.bf16.msra.mxu0 0
        %849 = vmatprep.subr.bf16.mxu0 0
        %850 = vmatpush2.bf16.msra.mxu0 0
        %851 = vmatprep.mubr.bf16.mxu0 0
        %852 = vmatmul.mubr.bf16.gmra.mxu0 %v489
        %v853 = vpop.f32.mrf.mxu0
        %v854 = vadd.f32 0.0, %v853
        %v855 = vpop.f32.mrf.mxu0
        %v856 = vadd.f32 0.0, %v855
        %v857 = vpop.f32.mrf.mxu0
        %v858 = vpop.f32.mrf.mxu0
        %859 = vdwg.mxu0
        %860 = vmatprep.subr.bf16.mxu0 %v729
        %861 = vmatpush1.bf16.msra.mxu0 %v728
        %862 = vmatprep.subr.bf16.mxu0 %v723
        %863 = vmatpush1.bf16.msra.mxu0 %v722
        %864 = vmatprep.subr.bf16.mxu0 %v717
        %865 = vmatpush1.bf16.msra.mxu0 %v716
        %866 = vmatprep.subr.bf16.mxu0 %v711
        %867 = vmatpush1.bf16.msra.mxu0 %v710
        %868 = vmatprep.subr.bf16.mxu0 %v705
        %869 = vmatpush1.bf16.msra.mxu0 %v704
        %870 = vmatprep.subr.bf16.mxu0 %v699
        %871 = vmatpush1.bf16.msra.mxu0 %v698
        %872 = vmatprep.subr.bf16.mxu0 %v693
        %873 = vmatpush1.bf16.msra.mxu0 %v692
        %874 = vmatprep.subr.bf16.mxu0 %v687
        %875 = vmatpush1.bf16.msra.mxu0 %v686
        %876 = vmatprep.subr.bf16.mxu0 0
        %877 = vmatpush2.bf16.msra.mxu0 0
        %878 = vmatprep.subr.bf16.mxu0 0
        %879 = vmatpush2.bf16.msra.mxu0 0
        %880 = vmatprep.subr.bf16.mxu0 0
        %881 = vmatpush2.bf16.msra.mxu0 0
        %882 = vmatprep.subr.bf16.mxu0 0
        %883 = vmatpush2.bf16.msra.mxu0 0
        %884 = vmatprep.subr.bf16.mxu0 0
        %885 = vmatpush2.bf16.msra.mxu0 0
        %886 = vmatprep.subr.bf16.mxu0 0
        %887 = vmatpush2.bf16.msra.mxu0 0
        %888 = vmatprep.subr.bf16.mxu0 0
        %889 = vmatpush2.bf16.msra.mxu0 0
        %890 = vmatprep.subr.bf16.mxu0 0
        %891 = vmatpush2.bf16.msra.mxu0 0
        %892 = vmatprep.mubr.bf16.mxu0 0
        %893 = vmatmul.mubr.bf16.gmra.mxu0 %v489
        %v894 = vpop.f32.mrf.mxu0
        %v895 = vadd.f32 0.0, %v894
        %v896 = vpop.f32.mrf.mxu0
        %v897 = vadd.f32 0.0, %v896
        %v898 = vpop.f32.mrf.mxu0
        %v899 = vpop.f32.mrf.mxu0
        %900 = vdwg.mxu0
        %v901 = vld [vmem:[#allocation9] sm:$0xf]
        %v902 = vld [vmem:[#allocation9 + $0x4] sm:$0xf]
        %v903 = vld [vmem:[#allocation9 + $0x8] sm:$0xf]
        %v904 = vld [vmem:[#allocation9 + $0xc] sm:$0xf]
        %v905 = vld [vmem:[#allocation9 + $0x10] sm:$0xf]
        %v906 = vld [vmem:[#allocation9 + $0x14] sm:$0xf]
        %v907 = vld [vmem:[#allocation9 + $0x18] sm:$0xf]
        %v908 = vld [vmem:[#allocation9 + $0x1c] sm:$0xf]
        %v909 = vld [vmem:[#allocation9 + $0x20] sm:$0xf]
        %v910 = vld [vmem:[#allocation9 + $0x24] sm:$0xf]
        %v911 = vld [vmem:[#allocation9 + $0x28] sm:$0xf]
        %v912 = vld [vmem:[#allocation9 + $0x2c] sm:$0xf]
        %v913 = vld [vmem:[#allocation9 + $0x30] sm:$0xf]
        %v914 = vld [vmem:[#allocation9 + $0x34] sm:$0xf]
        %v915 = vld [vmem:[#allocation9 + $0x38] sm:$0xf]
        %v916 = vld [vmem:[#allocation9 + $0x3c] sm:$0xf]
        %v917 = vld [vmem:[#allocation9 + $0x40] sm:$0xf]
        %v918 = vld [vmem:[#allocation9 + $0x44] sm:$0xf]
        %v919 = vld [vmem:[#allocation9 + $0x48] sm:$0xf]
        %v920 = vld [vmem:[#allocation9 + $0x4c] sm:$0xf]
        %v921 = vld [vmem:[#allocation9 + $0x50] sm:$0xf]
        %v922 = vld [vmem:[#allocation9 + $0x54] sm:$0xf]
        %v923 = vld [vmem:[#allocation9 + $0x58] sm:$0xf]
        %v924 = vld [vmem:[#allocation9 + $0x5c] sm:$0xf]
        %v925 = vld [vmem:[#allocation9 + $0x60] sm:$0xf]
        %v926 = vld [vmem:[#allocation9 + $0x64] sm:$0xf]
        %v927 = vld [vmem:[#allocation9 + $0x68] sm:$0xf]
        %v928 = vld [vmem:[#allocation9 + $0x6c] sm:$0xf]
        %v929 = vld [vmem:[#allocation9 + $0x70] sm:$0xf]
        %v930 = vld [vmem:[#allocation9 + $0x74] sm:$0xf]
        %v931 = vld [vmem:[#allocation9 + $0x78] sm:$0xf]
        %v932 = vld [vmem:[#allocation9 + $0x7c] sm:$0xf]
        %v933 = vpack.c.bf16 %v813, %v813
        %v934 = vpack.c.bf16 %v815, %v815
        %v935 = vpack.c.bf16 %v854, %v854
        %v936 = vpack.c.bf16 %v856, %v856
        %v937 = vpack.c.bf16 %v895, %v895
        %v938 = vpack.c.bf16 %v897, %v897
        %939 = vmatprep.subr.bf16.mxu0 0
        %940 = vmatpush1.bf16.xpose.msra.mxu0 0
        %941 = vmatprep.subr.bf16.mxu0 0
        %942 = vmatpush1.bf16.xpose.msra.mxu0 0
        %943 = vmatprep.subr.bf16.mxu0 0
        %944 = vmatpush1.bf16.xpose.msra.mxu0 0
        %945 = vmatprep.subr.bf16.mxu0 0
        %946 = vmatpush1.bf16.xpose.msra.mxu0 0
        %947 = vmatprep.subr.bf16.mxu0 0
        %948 = vmatpush1.bf16.xpose.msra.mxu0 0
        %949 = vmatprep.subr.bf16.mxu0 0
        %950 = vmatpush1.bf16.xpose.msra.mxu0 0
        %951 = vmatprep.subr.bf16.mxu0 0
        %952 = vmatpush1.bf16.xpose.msra.mxu0 0
        %953 = vmatprep.subr.bf16.mxu0 0
        %954 = vmatpush1.bf16.xpose.msra.mxu0 %v935
        %955 = vmatprep.subr.bf16.mxu0 0
        %956 = vmatpush2.bf16.xpose.msra.mxu0 0
        %957 = vmatprep.subr.bf16.mxu0 0
        %958 = vmatpush2.bf16.xpose.msra.mxu0 0
        %959 = vmatprep.subr.bf16.mxu0 0
        %960 = vmatpush2.bf16.xpose.msra.mxu0 0
        %961 = vmatprep.subr.bf16.mxu0 0
        %962 = vmatpush2.bf16.xpose.msra.mxu0 0
        %963 = vmatprep.subr.bf16.mxu0 0
        %964 = vmatpush2.bf16.xpose.msra.mxu0 0
        %965 = vmatprep.subr.bf16.mxu0 0
        %966 = vmatpush2.bf16.xpose.msra.mxu0 0
        %967 = vmatprep.subr.bf16.mxu0 0
        %968 = vmatpush2.bf16.xpose.msra.mxu0 0
        %969 = vmatprep.subr.bf16.mxu0 0
        %970 = vmatpush2.bf16.xpose.msra.mxu0 0
        %971 = vmatprep.mubr.bf16.mxu0 0
        %972 = vmatmul.mubr.bf16.gmra.mxu0 %v933
        %v973 = vpop.f32.mrf.mxu0
        %v974 = vadd.f32 0.0, %v973
        %v975 = vpop.f32.mrf.mxu0
        %v976 = vpop.f32.mrf.mxu0
        %v977 = vpop.f32.mrf.mxu0
        %978 = vdwg.mxu0
        %vm979 = vcmask 64512
        %v980 = vsel %vm979, %v974, -inf
        %981 = vmax.xlane.f32.xlu0 %v980
        %v982 = vpop.xlane.xlu0 %981
        %v983 = vsub.f32 %v974, %v982
        %v984 = vmul.f32 %v983, 1.442695
        %v985 = vpow.pop %v984
        %v986 = vsel %vm979, %v985, 0.0
        %987 = vadd.xlane.f32.xlu0 %v986
        %v988 = vpop.xlane.xlu0 %987
        %v989 = vpack.c.bf16 %v985, %v985
        %v991 = vsel %vm979, %v989, 0
        %vm993 = vcmask 1043456
        %v995 = vsel %vm993, %v937, 0
        %997 = vmatprep.subr.bf16.mxu0 0
        %998 = vmatpush1.bf16.msra.mxu0 0
        %999 = vmatprep.subr.bf16.mxu0 0
        %1000 = vmatpush1.bf16.msra.mxu0 0
        %1001 = vmatprep.subr.bf16.mxu0 0
        %1002 = vmatpush1.bf16.msra.mxu0 0
        %1003 = vmatprep.subr.bf16.mxu0 0
        %1004 = vmatpush1.bf16.msra.mxu0 0
        %1005 = vmatprep.subr.bf16.mxu0 0
        %1006 = vmatpush1.bf16.msra.mxu0 0
        %1007 = vmatprep.subr.bf16.mxu0 0
        %1008 = vmatpush1.bf16.msra.mxu0 0
        %1009 = vmatprep.subr.bf16.mxu0 0
        %1010 = vmatpush1.bf16.msra.mxu0 0
        %1011 = vmatprep.subr.bf16.mxu0 0
        %1012 = vmatpush1.bf16.msra.mxu0 %v995
        %1013 = vmatprep.subr.bf16.mxu0 0
        %1014 = vmatpush2.bf16.msra.mxu0 0
        %1015 = vmatprep.subr.bf16.mxu0 0
        %1016 = vmatpush2.bf16.msra.mxu0 0
        %1017 = vmatprep.subr.bf16.mxu0 0
        %1018 = vmatpush2.bf16.msra.mxu0 0
        %1019 = vmatprep.subr.bf16.mxu0 0
        %1020 = vmatpush2.bf16.msra.mxu0 0
        %1021 = vmatprep.subr.bf16.mxu0 0
        %1022 = vmatpush2.bf16.msra.mxu0 0
        %1023 = vmatprep.subr.bf16.mxu0 0
        %1024 = vmatpush2.bf16.msra.mxu0 0
        %1025 = vmatprep.subr.bf16.mxu0 0
        %1026 = vmatpush2.bf16.msra.mxu0 0
        %1027 = vmatprep.subr.bf16.mxu0 0
        %1028 = vmatpush2.bf16.msra.mxu0 0
        %1029 = vmatprep.mubr.bf16.mxu0 0
        %1030 = vmatmul.mubr.bf16.gmra.mxu0 %v991
        %v1031 = vpop.f32.mrf.mxu0
        %v1032 = vadd.f32 0.0, %v1031
        %v1033 = vpop.f32.mrf.mxu0
        %v1034 = vpop.f32.mrf.mxu0
        %v1035 = vpop.f32.mrf.mxu0
        %1036 = vdwg.mxu0
        %v1037 = vrcp.pop %v988
        %v1038 = vmul.f32 %v1032, %v1037
        %1039 = vst [vmem:[#allocation3] sm:$0xff] %v1038
        %1040 = vmatprep.subr.bf16.mxu0 0
        %1041 = vmatpush1.bf16.xpose.msra.mxu0 0
        %1042 = vmatprep.subr.bf16.mxu0 0
        %1043 = vmatpush1.bf16.xpose.msra.mxu0 0
        %1044 = vmatprep.subr.bf16.mxu0 0
        %1045 = vmatpush1.bf16.xpose.msra.mxu0 0
        %1046 = vmatprep.subr.bf16.mxu0 0
        %1047 = vmatpush1.bf16.xpose.msra.mxu0 0
        %1048 = vmatprep.subr.bf16.mxu0 0
        %1049 = vmatpush1.bf16.xpose.msra.mxu0 0
        %1050 = vmatprep.subr.bf16.mxu0 0
        %1051 = vmatpush1.bf16.xpose.msra.mxu0 0
        %1052 = vmatprep.subr.bf16.mxu0 0
        %1053 = vmatpush1.bf16.xpose.msra.mxu0 0
        %1054 = vmatprep.subr.bf16.mxu0 0
        %1055 = vmatpush1.bf16.xpose.msra.mxu0 %v936
        %1056 = vmatprep.subr.bf16.mxu0 0
        %1057 = vmatpush2.bf16.xpose.msra.mxu0 0
        %1058 = vmatprep.subr.bf16.mxu0 0
        %1059 = vmatpush2.bf16.xpose.msra.mxu0 0
        %1060 = vmatprep.subr.bf16.mxu0 0
        %1061 = vmatpush2.bf16.xpose.msra.mxu0 0
        %1062 = vmatprep.subr.bf16.mxu0 0
        %1063 = vmatpush2.bf16.xpose.msra.mxu0 0
        %1064 = vmatprep.subr.bf16.mxu0 0
        %1065 = vmatpush2.bf16.xpose.msra.mxu0 0
        %1066 = vmatprep.subr.bf16.mxu0 0
        %1067 = vmatpush2.bf16.xpose.msra.mxu0 0
        %1068 = vmatprep.subr.bf16.mxu0 0
        %1069 = vmatpush2.bf16.xpose.msra.mxu0 0
        %1070 = vmatprep.subr.bf16.mxu0 0
        %1071 = vmatpush2.bf16.xpose.msra.mxu0 0
        %1072 = vmatprep.mubr.bf16.mxu0 0
        %1073 = vmatmul.mubr.bf16.gmra.mxu0 %v934
        %v1074 = vpop.f32.mrf.mxu0
        %v1075 = vadd.f32 0.0, %v1074
        %v1076 = vpop.f32.mrf.mxu0
        %v1077 = vpop.f32.mrf.mxu0
        %v1078 = vpop.f32.mrf.mxu0
        %1079 = vdwg.mxu0
        %v1080 = vsel %vm979, %v1075, -inf
        %1081 = vmax.xlane.f32.xlu0 %v1080
        %v1082 = vpop.xlane.xlu0 %1081
        %v1083 = vsub.f32 %v1075, %v1082
        %v1084 = vmul.f32 %v1083, 1.442695
        %v1085 = vpow.pop %v1084
        %v1086 = vsel %vm979, %v1085, 0.0
        %1087 = vadd.xlane.f32.xlu0 %v1086
        %v1088 = vpop.xlane.xlu0 %1087
        %v1089 = vpack.c.bf16 %v1085, %v1085
        %v1091 = vsel %vm979, %v1089, 0
        %v1094 = vsel %vm993, %v938, 0
        %1096 = vmatprep.subr.bf16.mxu0 0
        %1097 = vmatpush1.bf16.msra.mxu0 0
        %1098 = vmatprep.subr.bf16.mxu0 0
        %1099 = vmatpush1.bf16.msra.mxu0 0
        %1100 = vmatprep.subr.bf16.mxu0 0
        %1101 = vmatpush1.bf16.msra.mxu0 0
        %1102 = vmatprep.subr.bf16.mxu0 0
        %1103 = vmatpush1.bf16.msra.mxu0 0
        %1104 = vmatprep.subr.bf16.mxu0 0
        %1105 = vmatpush1.bf16.msra.mxu0 0
        %1106 = vmatprep.subr.bf16.mxu0 0
        %1107 = vmatpush1.bf16.msra.mxu0 0
        %1108 = vmatprep.subr.bf16.mxu0 0
        %1109 = vmatpush1.bf16.msra.mxu0 0
        %1110 = vmatprep.subr.bf16.mxu0 0
        %1111 = vmatpush1.bf16.msra.mxu0 %v1094
        %1112 = vmatprep.subr.bf16.mxu0 0
        %1113 = vmatpush2.bf16.msra.mxu0 0
        %1114 = vmatprep.subr.bf16.mxu0 0
        %1115 = vmatpush2.bf16.msra.mxu0 0
        %1116 = vmatprep.subr.bf16.mxu0 0
        %1117 = vmatpush2.bf16.msra.mxu0 0
        %1118 = vmatprep.subr.bf16.mxu0 0
        %1119 = vmatpush2.bf16.msra.mxu0 0
        %1120 = vmatprep.subr.bf16.mxu0 0
        %1121 = vmatpush2.bf16.msra.mxu0 0
        %1122 = vmatprep.subr.bf16.mxu0 0
        %1123 = vmatpush2.bf16.msra.mxu0 0
        %1124 = vmatprep.subr.bf16.mxu0 0
        %1125 = vmatpush2.bf16.msra.mxu0 0
        %1126 = vmatprep.subr.bf16.mxu0 0
        %1127 = vmatpush2.bf16.msra.mxu0 0
        %1128 = vmatprep.mubr.bf16.mxu0 0
        %1129 = vmatmul.mubr.bf16.gmra.mxu0 %v1091
        %v1130 = vpop.f32.mrf.mxu0
        %v1131 = vadd.f32 0.0, %v1130
        %v1132 = vpop.f32.mrf.mxu0
        %v1133 = vpop.f32.mrf.mxu0
        %v1134 = vpop.f32.mrf.mxu0
        %1135 = vdwg.mxu0
        %v1136 = vrcp.pop %v1088
        %v1137 = vmul.f32 %v1131, %v1136
        %1138 = vst [vmem:[#allocation3 + $0x8] sm:$0xff] %v1137
        %v1139 = vld [vmem:[#allocation3] sm:$0xff]
        %v1140 = vld [vmem:[#allocation3 + $0x8] sm:$0xff]
        %v1141 = vpack.c.bf16 %v1139, %v1139
        %v1142 = vpack.c.bf16 %v1140, %v1140
        %v1175 = vunpack.c.l.b16 %v901
        %v1176 = vunpack.c.l.b16 %v902
        %v1177 = vunpack.c.l.b16 %v903
        %v1178 = vunpack.c.l.b16 %v904
        %v1179 = vunpack.c.l.b16 %v905
        %v1180 = vunpack.c.l.b16 %v906
        %v1181 = vunpack.c.l.b16 %v907
        %v1182 = vunpack.c.l.b16 %v908
        %v1183 = vunpack.c.l.b16 %v909
        %v1184 = vunpack.c.l.b16 %v910
        %v1185 = vunpack.c.l.b16 %v911
        %v1186 = vunpack.c.l.b16 %v912
        %v1187 = vunpack.c.l.b16 %v913
        %v1188 = vunpack.c.l.b16 %v914
        %v1189 = vunpack.c.l.b16 %v915
        %v1190 = vunpack.c.l.b16 %v916
        %v1191 = vunpack.c.l.b16 %v917
        %v1192 = vunpack.c.l.b16 %v918
        %v1193 = vunpack.c.l.b16 %v919
        %v1194 = vunpack.c.l.b16 %v920
        %v1195 = vunpack.c.l.b16 %v921
        %v1196 = vunpack.c.l.b16 %v922
        %v1197 = vunpack.c.l.b16 %v923
        %v1198 = vunpack.c.l.b16 %v924
        %v1199 = vunpack.c.l.b16 %v925
        %v1200 = vunpack.c.l.b16 %v926
        %v1201 = vunpack.c.l.b16 %v927
        %v1202 = vunpack.c.l.b16 %v928
        %v1203 = vunpack.c.l.b16 %v929
        %v1204 = vunpack.c.l.b16 %v930
        %v1205 = vunpack.c.l.b16 %v931
        %v1206 = vunpack.c.l.b16 %v932
        %v1207 = vpack.c.b16 %v1176, %v1175
        %v1208 = vpack.c.b16 %v1178, %v1177
        %v1209 = vpack.c.b16 %v1180, %v1179
        %v1210 = vpack.c.b16 %v1182, %v1181
        %v1211 = vpack.c.b16 %v1184, %v1183
        %v1212 = vpack.c.b16 %v1186, %v1185
        %v1213 = vpack.c.b16 %v1188, %v1187
        %v1214 = vpack.c.b16 %v1190, %v1189
        %v1215 = vpack.c.b16 %v1192, %v1191
        %v1216 = vpack.c.b16 %v1194, %v1193
        %v1217 = vpack.c.b16 %v1196, %v1195
        %v1218 = vpack.c.b16 %v1198, %v1197
        %v1219 = vpack.c.b16 %v1200, %v1199
        %v1220 = vpack.c.b16 %v1202, %v1201
        %v1221 = vpack.c.b16 %v1204, %v1203
        %v1222 = vpack.c.b16 %v1206, %v1205
        %1239 = vmatprep.subr.bf16.mxu0 0
        %1240 = vmatpush1.bf16.msra.mxu0 %v1214
        %1241 = vmatprep.subr.bf16.mxu0 0
        %1242 = vmatpush1.bf16.msra.mxu0 %v1213
        %1243 = vmatprep.subr.bf16.mxu0 0
        %1244 = vmatpush1.bf16.msra.mxu0 %v1212
        %1245 = vmatprep.subr.bf16.mxu0 0
        %1246 = vmatpush1.bf16.msra.mxu0 %v1211
        %1247 = vmatprep.subr.bf16.mxu0 0
        %1248 = vmatpush1.bf16.msra.mxu0 %v1210
        %1249 = vmatprep.subr.bf16.mxu0 0
        %1250 = vmatpush1.bf16.msra.mxu0 %v1209
        %1251 = vmatprep.subr.bf16.mxu0 0
        %1252 = vmatpush1.bf16.msra.mxu0 %v1208
        %1253 = vmatprep.subr.bf16.mxu0 0
        %1254 = vmatpush1.bf16.msra.mxu0 %v1207
        %1255 = vmatprep.subr.bf16.mxu0 0
        %1256 = vmatpush2.bf16.msra.mxu0 %v1222
        %1257 = vmatprep.subr.bf16.mxu0 0
        %1258 = vmatpush2.bf16.msra.mxu0 %v1221
        %1259 = vmatprep.subr.bf16.mxu0 0
        %1260 = vmatpush2.bf16.msra.mxu0 %v1220
        %1261 = vmatprep.subr.bf16.mxu0 0
        %1262 = vmatpush2.bf16.msra.mxu0 %v1219
        %1263 = vmatprep.subr.bf16.mxu0 0
        %1264 = vmatpush2.bf16.msra.mxu0 %v1218
        %1265 = vmatprep.subr.bf16.mxu0 0
        %1266 = vmatpush2.bf16.msra.mxu0 %v1217
        %1267 = vmatprep.subr.bf16.mxu0 0
        %1268 = vmatpush2.bf16.msra.mxu0 %v1216
        %1269 = vmatprep.subr.bf16.mxu0 0
        %1270 = vmatpush2.bf16.msra.mxu0 %v1215
        %1271 = vmatprep.mubr.bf16.mxu0 %v1142
        %1272 = vmatmul.mubr.bf16.gmra.mxu0 %v1141
        %v1273 = vpop.f32.mrf.mxu0
        %v1274 = vadd.f32 0.0, %v1273
        %v1275 = vpop.f32.mrf.mxu0
        %v1276 = vpop.f32.mrf.mxu0
        %v1277 = vpop.f32.mrf.mxu0
        %1278 = vdwg.mxu0
        %1279 = vst [vmem:[#allocation2] sm:$0xff] %v1274
        %v1280 = vld [vmem:[#allocation2] sm:$0xff]
        %v1281 = vld [vmem:[%s3] sm:$0x1]
        %v1283 = vlaneseq
        %v1284 = vshrl.u32 %v1283, 7
        %v1285 = vsub.s32 0, %v1284
        %v1286 = vrot.slane %v1281, %v1285
        %v1288 = vadd.f32 %v1280, %v1286
        %v1289 = vadd.f32 %v1288, %v488
        %v1290 = vld [vmem:[%s4] sm:$0x1]
        %v1291 = vld [vmem:[%s5] sm:$0x1]
        %1292 = vadd.xlane.f32.xlu0 %v1289
        %v1293 = vpop.xlane.xlu0 %1292
        %v1294 = vmul.f32 %v1293, 0.0078125
        %v1295 = vsub.f32 %v1289, %v1294
        %v1296 = vmul.f32 %v1295, %v1295
        %1297 = vadd.xlane.f32.xlu0 %v1296
        %v1298 = vpop.xlane.xlu0 %1297
        %v1299 = vmul.f32 %v1298, 0.0078125
        %v1300 = vadd.f32 %v1299, 1e-05
        %v1301 = vrsqrt.pop %v1300
        %v1302 = vmul.f32 %v1295, %v1301
        %v1304 = vlaneseq
        %v1305 = vshrl.u32 %v1304, 7
        %v1306 = vsub.s32 0, %v1305
        %v1307 = vrot.slane %v1290, %v1306
        %v1309 = vmul.f32 %v1302, %v1307
        %v1311 = vlaneseq
        %v1312 = vshrl.u32 %v1311, 7
        %v1313 = vsub.s32 0, %v1312
        %v1314 = vrot.slane %v1291, %v1313
        %v1316 = vadd.f32 %v1309, %v1314
        %v1317 = vpack.c.bf16 %v1316, %v1316
        %v1318 = vld [vmem:[#allocation10] sm:$0xff]
        %v1319 = vld [vmem:[#allocation10 + $0x8] sm:$0xff]
        %v1320 = vld [vmem:[#allocation10 + $0x10] sm:$0xff]
        %v1321 = vld [vmem:[#allocation10 + $0x18] sm:$0xff]
        %v1322 = vld [vmem:[#allocation10 + $0x20] sm:$0xff]
        %v1323 = vld [vmem:[#allocation10 + $0x28] sm:$0xff]
        %v1324 = vld [vmem:[#allocation10 + $0x30] sm:$0xff]
        %v1325 = vld [vmem:[#allocation10 + $0x38] sm:$0xff]
        %v1326 = vld [vmem:[#allocation10 + $0x40] sm:$0xff]
        %v1327 = vld [vmem:[#allocation10 + $0x48] sm:$0xff]
        %v1328 = vld [vmem:[#allocation10 + $0x50] sm:$0xff]
        %v1329 = vld [vmem:[#allocation10 + $0x58] sm:$0xff]
        %v1330 = vld [vmem:[#allocation10 + $0x60] sm:$0xff]
        %v1331 = vld [vmem:[#allocation10 + $0x68] sm:$0xff]
        %v1332 = vld [vmem:[#allocation10 + $0x70] sm:$0xff]
        %v1333 = vld [vmem:[#allocation10 + $0x78] sm:$0xff]
        %v1334 = vld [vmem:[#allocation10 + $0x80] sm:$0xff]
        %v1335 = vld [vmem:[#allocation10 + $0x88] sm:$0xff]
        %v1336 = vld [vmem:[#allocation10 + $0x90] sm:$0xff]
        %v1337 = vld [vmem:[#allocation10 + $0x98] sm:$0xff]
        %v1338 = vld [vmem:[#allocation10 + $0xa0] sm:$0xff]
        %v1339 = vld [vmem:[#allocation10 + $0xa8] sm:$0xff]
        %v1340 = vld [vmem:[#allocation10 + $0xb0] sm:$0xff]
        %v1341 = vld [vmem:[#allocation10 + $0xb8] sm:$0xff]
        %v1342 = vld [vmem:[#allocation10 + $0xc0] sm:$0xff]
        %v1343 = vld [vmem:[#allocation10 + $0xc8] sm:$0xff]
        %v1344 = vld [vmem:[#allocation10 + $0xd0] sm:$0xff]
        %v1345 = vld [vmem:[#allocation10 + $0xd8] sm:$0xff]
        %v1346 = vld [vmem:[#allocation10 + $0xe0] sm:$0xff]
        %v1347 = vld [vmem:[#allocation10 + $0xe8] sm:$0xff]
        %v1348 = vld [vmem:[#allocation10 + $0xf0] sm:$0xff]
        %v1349 = vld [vmem:[#allocation10 + $0xf8] sm:$0xff]
        %v1350 = vld [vmem:[%s7] sm:$0xf]
        %v1352 = vlaneseq
        %v1353 = vshrl.u32 %v1352, 7
        %v1354 = vsub.s32 0, %v1353
        %v1355 = vrot.slane %v1350, %v1354
        %v1356 = vlaneseq
        %v1357 = vshrl.u32 %v1356, 7
        %v1358 = vsub.s32 1, %v1357
        %v1359 = vrot.slane %v1350, %v1358
        %v1360 = vlaneseq
        %v1361 = vshrl.u32 %v1360, 7
        %v1362 = vsub.s32 2, %v1361
        %v1363 = vrot.slane %v1350, %v1362
        %v1364 = vlaneseq
        %v1365 = vshrl.u32 %v1364, 7
        %v1366 = vsub.s32 3, %v1365
        %v1367 = vrot.slane %v1350, %v1366
        %v1404 = vunpack.c.l.b16 %v1318
        %v1405 = vunpack.c.h.b16 %v1318
        %v1406 = vunpack.c.l.b16 %v1319
        %v1407 = vunpack.c.h.b16 %v1319
        %v1408 = vunpack.c.l.b16 %v1320
        %v1409 = vunpack.c.h.b16 %v1320
        %v1410 = vunpack.c.l.b16 %v1321
        %v1411 = vunpack.c.h.b16 %v1321
        %v1412 = vunpack.c.l.b16 %v1322
        %v1413 = vunpack.c.h.b16 %v1322
        %v1414 = vunpack.c.l.b16 %v1323
        %v1415 = vunpack.c.h.b16 %v1323
        %v1416 = vunpack.c.l.b16 %v1324
        %v1417 = vunpack.c.h.b16 %v1324
        %v1418 = vunpack.c.l.b16 %v1325
        %v1419 = vunpack.c.h.b16 %v1325
        %v1420 = vunpack.c.l.b16 %v1326
        %v1421 = vunpack.c.h.b16 %v1326
        %v1422 = vunpack.c.l.b16 %v1327
        %v1423 = vunpack.c.h.b16 %v1327
        %v1424 = vunpack.c.l.b16 %v1328
        %v1425 = vunpack.c.h.b16 %v1328
        %v1426 = vunpack.c.l.b16 %v1329
        %v1427 = vunpack.c.h.b16 %v1329
        %v1428 = vunpack.c.l.b16 %v1330
        %v1429 = vunpack.c.h.b16 %v1330
        %v1430 = vunpack.c.l.b16 %v1331
        %v1431 = vunpack.c.h.b16 %v1331
        %v1432 = vunpack.c.l.b16 %v1332
        %v1433 = vunpack.c.h.b16 %v1332
        %v1434 = vunpack.c.l.b16 %v1333
        %v1435 = vunpack.c.h.b16 %v1333
        %v1436 = vunpack.c.l.b16 %v1334
        %v1437 = vunpack.c.h.b16 %v1334
        %v1438 = vunpack.c.l.b16 %v1335
        %v1439 = vunpack.c.h.b16 %v1335
        %v1440 = vunpack.c.l.b16 %v1336
        %v1441 = vunpack.c.h.b16 %v1336
        %v1442 = vunpack.c.l.b16 %v1337
        %v1443 = vunpack.c.h.b16 %v1337
        %v1444 = vunpack.c.l.b16 %v1338
        %v1445 = vunpack.c.h.b16 %v1338
        %v1446 = vunpack.c.l.b16 %v1339
        %v1447 = vunpack.c.h.b16 %v1339
        %v1448 = vunpack.c.l.b16 %v1340
        %v1449 = vunpack.c.h.b16 %v1340
        %v1450 = vunpack.c.l.b16 %v1341
        %v1451 = vunpack.c.h.b16 %v1341
        %v1452 = vunpack.c.l.b16 %v1342
        %v1453 = vunpack.c.h.b16 %v1342
        %v1454 = vunpack.c.l.b16 %v1343
        %v1455 = vunpack.c.h.b16 %v1343
        %v1456 = vunpack.c.l.b16 %v1344
        %v1457 = vunpack.c.h.b16 %v1344
        %v1458 = vunpack.c.l.b16 %v1345
        %v1459 = vunpack.c.h.b16 %v1345
        %v1460 = vunpack.c.l.b16 %v1346
        %v1461 = vunpack.c.h.b16 %v1346
        %v1462 = vunpack.c.l.b16 %v1347
        %v1463 = vunpack.c.h.b16 %v1347
        %v1464 = vunpack.c.l.b16 %v1348
        %v1465 = vunpack.c.h.b16 %v1348
        %v1466 = vunpack.c.l.b16 %v1349
        %v1467 = vunpack.c.h.b16 %v1349
        %v1468 = vpack.c.b16 %v1408, %v1404
        %v1469 = vpack.c.b16 %v1409, %v1405
        %v1470 = vpack.c.b16 %v1410, %v1406
        %v1471 = vpack.c.b16 %v1411, %v1407
        %v1472 = vpack.c.b16 %v1416, %v1412
        %v1473 = vpack.c.b16 %v1417, %v1413
        %v1474 = vpack.c.b16 %v1418, %v1414
        %v1475 = vpack.c.b16 %v1419, %v1415
        %v1476 = vpack.c.b16 %v1424, %v1420
        %v1477 = vpack.c.b16 %v1425, %v1421
        %v1478 = vpack.c.b16 %v1426, %v1422
        %v1479 = vpack.c.b16 %v1427, %v1423
        %v1480 = vpack.c.b16 %v1432, %v1428
        %v1481 = vpack.c.b16 %v1433, %v1429
        %v1482 = vpack.c.b16 %v1434, %v1430
        %v1483 = vpack.c.b16 %v1435, %v1431
        %v1484 = vpack.c.b16 %v1440, %v1436
        %v1485 = vpack.c.b16 %v1441, %v1437
        %v1486 = vpack.c.b16 %v1442, %v1438
        %v1487 = vpack.c.b16 %v1443, %v1439
        %v1488 = vpack.c.b16 %v1448, %v1444
        %v1489 = vpack.c.b16 %v1449, %v1445
        %v1490 = vpack.c.b16 %v1450, %v1446
        %v1491 = vpack.c.b16 %v1451, %v1447
        %v1492 = vpack.c.b16 %v1456, %v1452
        %v1493 = vpack.c.b16 %v1457, %v1453
        %v1494 = vpack.c.b16 %v1458, %v1454
        %v1495 = vpack.c.b16 %v1459, %v1455
        %v1496 = vpack.c.b16 %v1464, %v1460
        %v1497 = vpack.c.b16 %v1465, %v1461
        %v1498 = vpack.c.b16 %v1466, %v1462
        %v1499 = vpack.c.b16 %v1467, %v1463
        %1532 = vmatprep.subr.bf16.mxu0 %v1497
        %1533 = vmatpush1.bf16.msra.mxu0 %v1496
        %1534 = vmatprep.subr.bf16.mxu0 %v1493
        %1535 = vmatpush1.bf16.msra.mxu0 %v1492
        %1536 = vmatprep.subr.bf16.mxu0 %v1489
        %1537 = vmatpush1.bf16.msra.mxu0 %v1488
        %1538 = vmatprep.subr.bf16.mxu0 %v1485
        %1539 = vmatpush1.bf16.msra.mxu0 %v1484
        %1540 = vmatprep.subr.bf16.mxu0 %v1481
        %1541 = vmatpush1.bf16.msra.mxu0 %v1480
        %1542 = vmatprep.subr.bf16.mxu0 %v1477
        %1543 = vmatpush1.bf16.msra.mxu0 %v1476
        %1544 = vmatprep.subr.bf16.mxu0 %v1473
        %1545 = vmatpush1.bf16.msra.mxu0 %v1472
        %1546 = vmatprep.subr.bf16.mxu0 %v1469
        %1547 = vmatpush1.bf16.msra.mxu0 %v1468
        %1548 = vmatprep.subr.bf16.mxu0 0
        %1549 = vmatpush2.bf16.msra.mxu0 0
        %1550 = vmatprep.subr.bf16.mxu0 0
        %1551 = vmatpush2.bf16.msra.mxu0 0
        %1552 = vmatprep.subr.bf16.mxu0 0
        %1553 = vmatpush2.bf16.msra.mxu0 0
        %1554 = vmatprep.subr.bf16.mxu0 0
        %1555 = vmatpush2.bf16.msra.mxu0 0
        %1556 = vmatprep.subr.bf16.mxu0 0
        %1557 = vmatpush2.bf16.msra.mxu0 0
        %1558 = vmatprep.subr.bf16.mxu0 0
        %1559 = vmatpush2.bf16.msra.mxu0 0
        %1560 = vmatprep.subr.bf16.mxu0 0
        %1561 = vmatpush2.bf16.msra.mxu0 0
        %1562 = vmatprep.subr.bf16.mxu0 0
        %1563 = vmatpush2.bf16.msra.mxu0 0
        %1564 = vmatprep.mubr.bf16.mxu0 0
        %1565 = vmatmul.mubr.bf16.gmra.mxu0 %v1317
        %v1566 = vpop.f32.mrf.mxu0
        %v1567 = vadd.f32 %v1355, %v1566
        %v1568 = vpop.f32.mrf.mxu0
        %v1569 = vadd.f32 %v1359, %v1568
        %v1570 = vpop.f32.mrf.mxu0
        %v1571 = vpop.f32.mrf.mxu0
        %1572 = vdwg.mxu0
        %1573 = vmatprep.subr.bf16.mxu0 %v1499
        %1574 = vmatpush1.bf16.msra.mxu0 %v1498
        %1575 = vmatprep.subr.bf16.mxu0 %v1495
        %1576 = vmatpush1.bf16.msra.mxu0 %v1494
        %1577 = vmatprep.subr.bf16.mxu0 %v1491
        %1578 = vmatpush1.bf16.msra.mxu0 %v1490
        %1579 = vmatprep.subr.bf16.mxu0 %v1487
        %1580 = vmatpush1.bf16.msra.mxu0 %v1486
        %1581 = vmatprep.subr.bf16.mxu0 %v1483
        %1582 = vmatpush1.bf16.msra.mxu0 %v1482
        %1583 = vmatprep.subr.bf16.mxu0 %v1479
        %1584 = vmatpush1.bf16.msra.mxu0 %v1478
        %1585 = vmatprep.subr.bf16.mxu0 %v1475
        %1586 = vmatpush1.bf16.msra.mxu0 %v1474
        %1587 = vmatprep.subr.bf16.mxu0 %v1471
        %1588 = vmatpush1.bf16.msra.mxu0 %v1470
        %1589 = vmatprep.subr.bf16.mxu0 0
        %1590 = vmatpush2.bf16.msra.mxu0 0
        %1591 = vmatprep.subr.bf16.mxu0 0
        %1592 = vmatpush2.bf16.msra.mxu0 0
        %1593 = vmatprep.subr.bf16.mxu0 0
        %1594 = vmatpush2.bf16.msra.mxu0 0
        %1595 = vmatprep.subr.bf16.mxu0 0
        %1596 = vmatpush2.bf16.msra.mxu0 0
        %1597 = vmatprep.subr.bf16.mxu0 0
        %1598 = vmatpush2.bf16.msra.mxu0 0
        %1599 = vmatprep.subr.bf16.mxu0 0
        %1600 = vmatpush2.bf16.msra.mxu0 0
        %1601 = vmatprep.subr.bf16.mxu0 0
        %1602 = vmatpush2.bf16.msra.mxu0 0
        %1603 = vmatprep.subr.bf16.mxu0 0
        %1604 = vmatpush2.bf16.msra.mxu0 0
        %1605 = vmatprep.mubr.bf16.mxu0 0
        %1606 = vmatmul.mubr.bf16.gmra.mxu0 %v1317
        %v1607 = vpop.f32.mrf.mxu0
        %v1608 = vadd.f32 %v1363, %v1607
        %v1609 = vpop.f32.mrf.mxu0
        %v1610 = vadd.f32 %v1367, %v1609
        %v1611 = vpop.f32.mrf.mxu0
        %v1612 = vpop.f32.mrf.mxu0
        %1613 = vdwg.mxu0
        %v1614 = vmax.f32 %v1567, 0.0
        %v1615 = vmax.f32 %v1569, 0.0
        %v1616 = vmax.f32 %v1608, 0.0
        %v1617 = vmax.f32 %v1610, 0.0
        %v1618 = vpack.c.bf16 %v1614, %v1614
        %v1619 = vpack.c.bf16 %v1615, %v1615
        %v1620 = vpack.c.bf16 %v1616, %v1616
        %v1621 = vpack.c.bf16 %v1617, %v1617
        %v1622 = vld [vmem:[#allocation12] sm:$0xf]
        %v1623 = vld [vmem:[#allocation12 + $0x4] sm:$0xf]
        %v1624 = vld [vmem:[#allocation12 + $0x8] sm:$0xf]
        %v1625 = vld [vmem:[#allocation12 + $0xc] sm:$0xf]
        %v1626 = vld [vmem:[#allocation12 + $0x10] sm:$0xf]
        %v1627 = vld [vmem:[#allocation12 + $0x14] sm:$0xf]
        %v1628 = vld [vmem:[#allocation12 + $0x18] sm:$0xf]
        %v1629 = vld [vmem:[#allocation12 + $0x1c] sm:$0xf]
        %v1630 = vld [vmem:[#allocation12 + $0x20] sm:$0xf]
        %v1631 = vld [vmem:[#allocation12 + $0x24] sm:$0xf]
        %v1632 = vld [vmem:[#allocation12 + $0x28] sm:$0xf]
        %v1633 = vld [vmem:[#allocation12 + $0x2c] sm:$0xf]
        %v1634 = vld [vmem:[#allocation12 + $0x30] sm:$0xf]
        %v1635 = vld [vmem:[#allocation12 + $0x34] sm:$0xf]
        %v1636 = vld [vmem:[#allocation12 + $0x38] sm:$0xf]
        %v1637 = vld [vmem:[#allocation12 + $0x3c] sm:$0xf]
        %v1638 = vld [vmem:[#allocation12 + $0x40] sm:$0xf]
        %v1639 = vld [vmem:[#allocation12 + $0x44] sm:$0xf]
        %v1640 = vld [vmem:[#allocation12 + $0x48] sm:$0xf]
        %v1641 = vld [vmem:[#allocation12 + $0x4c] sm:$0xf]
        %v1642 = vld [vmem:[#allocation12 + $0x50] sm:$0xf]
        %v1643 = vld [vmem:[#allocation12 + $0x54] sm:$0xf]
        %v1644 = vld [vmem:[#allocation12 + $0x58] sm:$0xf]
        %v1645 = vld [vmem:[#allocation12 + $0x5c] sm:$0xf]
        %v1646 = vld [vmem:[#allocation12 + $0x60] sm:$0xf]
        %v1647 = vld [vmem:[#allocation12 + $0x64] sm:$0xf]
        %v1648 = vld [vmem:[#allocation12 + $0x68] sm:$0xf]
        %v1649 = vld [vmem:[#allocation12 + $0x6c] sm:$0xf]
        %v1650 = vld [vmem:[#allocation12 + $0x70] sm:$0xf]
        %v1651 = vld [vmem:[#allocation12 + $0x74] sm:$0xf]
        %v1652 = vld [vmem:[#allocation12 + $0x78] sm:$0xf]
        %v1653 = vld [vmem:[#allocation12 + $0x7c] sm:$0xf]
        %v1654 = vld [vmem:[#allocation12 + $0x80] sm:$0xf]
        %v1655 = vld [vmem:[#allocation12 + $0x84] sm:$0xf]
        %v1656 = vld [vmem:[#allocation12 + $0x88] sm:$0xf]
        %v1657 = vld [vmem:[#allocation12 + $0x8c] sm:$0xf]
        %v1658 = vld [vmem:[#allocation12 + $0x90] sm:$0xf]
        %v1659 = vld [vmem:[#allocation12 + $0x94] sm:$0xf]
        %v1660 = vld [vmem:[#allocation12 + $0x98] sm:$0xf]
        %v1661 = vld [vmem:[#allocation12 + $0x9c] sm:$0xf]
        %v1662 = vld [vmem:[#allocation12 + $0xa0] sm:$0xf]
        %v1663 = vld [vmem:[#allocation12 + $0xa4] sm:$0xf]
        %v1664 = vld [vmem:[#allocation12 + $0xa8] sm:$0xf]
        %v1665 = vld [vmem:[#allocation12 + $0xac] sm:$0xf]
        %v1666 = vld [vmem:[#allocation12 + $0xb0] sm:$0xf]
        %v1667 = vld [vmem:[#allocation12 + $0xb4] sm:$0xf]
        %v1668 = vld [vmem:[#allocation12 + $0xb8] sm:$0xf]
        %v1669 = vld [vmem:[#allocation12 + $0xbc] sm:$0xf]
        %v1670 = vld [vmem:[#allocation12 + $0xc0] sm:$0xf]
        %v1671 = vld [vmem:[#allocation12 + $0xc4] sm:$0xf]
        %v1672 = vld [vmem:[#allocation12 + $0xc8] sm:$0xf]
        %v1673 = vld [vmem:[#allocation12 + $0xcc] sm:$0xf]
        %v1674 = vld [vmem:[#allocation12 + $0xd0] sm:$0xf]
        %v1675 = vld [vmem:[#allocation12 + $0xd4] sm:$0xf]
        %v1676 = vld [vmem:[#allocation12 + $0xd8] sm:$0xf]
        %v1677 = vld [vmem:[#allocation12 + $0xdc] sm:$0xf]
        %v1678 = vld [vmem:[#allocation12 + $0xe0] sm:$0xf]
        %v1679 = vld [vmem:[#allocation12 + $0xe4] sm:$0xf]
        %v1680 = vld [vmem:[#allocation12 + $0xe8] sm:$0xf]
        %v1681 = vld [vmem:[#allocation12 + $0xec] sm:$0xf]
        %v1682 = vld [vmem:[#allocation12 + $0xf0] sm:$0xf]
        %v1683 = vld [vmem:[#allocation12 + $0xf4] sm:$0xf]
        %v1684 = vld [vmem:[#allocation12 + $0xf8] sm:$0xf]
        %v1685 = vld [vmem:[#allocation12 + $0xfc] sm:$0xf]
        %v1686 = vld [vmem:[%s9] sm:$0x1]
        %v1688 = vlaneseq
        %v1689 = vshrl.u32 %v1688, 7
        %v1690 = vsub.s32 0, %v1689
        %v1691 = vrot.slane %v1686, %v1690
        %v1757 = vunpack.c.l.b16 %v1622
        %v1758 = vunpack.c.l.b16 %v1623
        %v1759 = vunpack.c.l.b16 %v1624
        %v1760 = vunpack.c.l.b16 %v1625
        %v1761 = vunpack.c.l.b16 %v1626
        %v1762 = vunpack.c.l.b16 %v1627
        %v1763 = vunpack.c.l.b16 %v1628
        %v1764 = vunpack.c.l.b16 %v1629
        %v1765 = vunpack.c.l.b16 %v1630
        %v1766 = vunpack.c.l.b16 %v1631
        %v1767 = vunpack.c.l.b16 %v1632
        %v1768 = vunpack.c.l.b16 %v1633
        %v1769 = vunpack.c.l.b16 %v1634
        %v1770 = vunpack.c.l.b16 %v1635
        %v1771 = vunpack.c.l.b16 %v1636
        %v1772 = vunpack.c.l.b16 %v1637
        %v1773 = vunpack.c.l.b16 %v1638
        %v1774 = vunpack.c.l.b16 %v1639
        %v1775 = vunpack.c.l.b16 %v1640
        %v1776 = vunpack.c.l.b16 %v1641
        %v1777 = vunpack.c.l.b16 %v1642
        %v1778 = vunpack.c.l.b16 %v1643
        %v1779 = vunpack.c.l.b16 %v1644
        %v1780 = vunpack.c.l.b16 %v1645
        %v1781 = vunpack.c.l.b16 %v1646
        %v1782 = vunpack.c.l.b16 %v1647
        %v1783 = vunpack.c.l.b16 %v1648
        %v1784 = vunpack.c.l.b16 %v1649
        %v1785 = vunpack.c.l.b16 %v1650
        %v1786 = vunpack.c.l.b16 %v1651
        %v1787 = vunpack.c.l.b16 %v1652
        %v1788 = vunpack.c.l.b16 %v1653
        %v1789 = vunpack.c.l.b16 %v1654
        %v1790 = vunpack.c.l.b16 %v1655
        %v1791 = vunpack.c.l.b16 %v1656
        %v1792 = vunpack.c.l.b16 %v1657
        %v1793 = vunpack.c.l.b16 %v1658
        %v1794 = vunpack.c.l.b16 %v1659
        %v1795 = vunpack.c.l.b16 %v1660
        %v1796 = vunpack.c.l.b16 %v1661
        %v1797 = vunpack.c.l.b16 %v1662
        %v1798 = vunpack.c.l.b16 %v1663
        %v1799 = vunpack.c.l.b16 %v1664
        %v1800 = vunpack.c.l.b16 %v1665
        %v1801 = vunpack.c.l.b16 %v1666
        %v1802 = vunpack.c.l.b16 %v1667
        %v1803 = vunpack.c.l.b16 %v1668
        %v1804 = vunpack.c.l.b16 %v1669
        %v1805 = vunpack.c.l.b16 %v1670
        %v1806 = vunpack.c.l.b16 %v1671
        %v1807 = vunpack.c.l.b16 %v1672
        %v1808 = vunpack.c.l.b16 %v1673
        %v1809 = vunpack.c.l.b16 %v1674
        %v1810 = vunpack.c.l.b16 %v1675
        %v1811 = vunpack.c.l.b16 %v1676
        %v1812 = vunpack.c.l.b16 %v1677
        %v1813 = vunpack.c.l.b16 %v1678
        %v1814 = vunpack.c.l.b16 %v1679
        %v1815 = vunpack.c.l.b16 %v1680
        %v1816 = vunpack.c.l.b16 %v1681
        %v1817 = vunpack.c.l.b16 %v1682
        %v1818 = vunpack.c.l.b16 %v1683
        %v1819 = vunpack.c.l.b16 %v1684
        %v1820 = vunpack.c.l.b16 %v1685
        %v1821 = vpack.c.b16 %v1758, %v1757
        %v1822 = vpack.c.b16 %v1760, %v1759
        %v1823 = vpack.c.b16 %v1762, %v1761
        %v1824 = vpack.c.b16 %v1764, %v1763
        %v1825 = vpack.c.b16 %v1766, %v1765
        %v1826 = vpack.c.b16 %v1768, %v1767
        %v1827 = vpack.c.b16 %v1770, %v1769
        %v1828 = vpack.c.b16 %v1772, %v1771
        %v1829 = vpack.c.b16 %v1774, %v1773
        %v1830 = vpack.c.b16 %v1776, %v1775
        %v1831 = vpack.c.b16 %v1778, %v1777
        %v1832 = vpack.c.b16 %v1780, %v1779
        %v1833 = vpack.c.b16 %v1782, %v1781
        %v1834 = vpack.c.b16 %v1784, %v1783
        %v1835 = vpack.c.b16 %v1786, %v1785
        %v1836 = vpack.c.b16 %v1788, %v1787
        %v1837 = vpack.c.b16 %v1790, %v1789
        %v1838 = vpack.c.b16 %v1792, %v1791
        %v1839 = vpack.c.b16 %v1794, %v1793
        %v1840 = vpack.c.b16 %v1796, %v1795
        %v1841 = vpack.c.b16 %v1798, %v1797
        %v1842 = vpack.c.b16 %v1800, %v1799
        %v1843 = vpack.c.b16 %v1802, %v1801
        %v1844 = vpack.c.b16 %v1804, %v1803
        %v1845 = vpack.c.b16 %v1806, %v1805
        %v1846 = vpack.c.b16 %v1808, %v1807
        %v1847 = vpack.c.b16 %v1810, %v1809
        %v1848 = vpack.c.b16 %v1812, %v1811
        %v1849 = vpack.c.b16 %v1814, %v1813
        %v1850 = vpack.c.b16 %v1816, %v1815
        %v1851 = vpack.c.b16 %v1818, %v1817
        %v1852 = vpack.c.b16 %v1820, %v1819
        %1885 = vmatprep.subr.bf16.mxu0 0
        %1886 = vmatpush1.bf16.msra.mxu0 %v1828
        %1887 = vmatprep.subr.bf16.mxu0 0
        %1888 = vmatpush1.bf16.msra.mxu0 %v1827
        %1889 = vmatprep.subr.bf16.mxu0 0
        %1890 = vmatpush1.bf16.msra.mxu0 %v1826
        %1891 = vmatprep.subr.bf16.mxu0 0
        %1892 = vmatpush1.bf16.msra.mxu0 %v1825
        %1893 = vmatprep.subr.bf16.mxu0 0
        %1894 = vmatpush1.bf16.msra.mxu0 %v1824
        %1895 = vmatprep.subr.bf16.mxu0 0
        %1896 = vmatpush1.bf16.msra.mxu0 %v1823
        %1897 = vmatprep.subr.bf16.mxu0 0
        %1898 = vmatpush1.bf16.msra.mxu0 %v1822
        %1899 = vmatprep.subr.bf16.mxu0 0
        %1900 = vmatpush1.bf16.msra.mxu0 %v1821
        %1901 = vmatprep.subr.bf16.mxu0 0
        %1902 = vmatpush2.bf16.msra.mxu0 %v1836
        %1903 = vmatprep.subr.bf16.mxu0 0
        %1904 = vmatpush2.bf16.msra.mxu0 %v1835
        %1905 = vmatprep.subr.bf16.mxu0 0
        %1906 = vmatpush2.bf16.msra.mxu0 %v1834
        %1907 = vmatprep.subr.bf16.mxu0 0
        %1908 = vmatpush2.bf16.msra.mxu0 %v1833
        %1909 = vmatprep.subr.bf16.mxu0 0
        %1910 = vmatpush2.bf16.msra.mxu0 %v1832
        %1911 = vmatprep.subr.bf16.mxu0 0
        %1912 = vmatpush2.bf16.msra.mxu0 %v1831
        %1913 = vmatprep.subr.bf16.mxu0 0
        %1914 = vmatpush2.bf16.msra.mxu0 %v1830
        %1915 = vmatprep.subr.bf16.mxu0 0
        %1916 = vmatpush2.bf16.msra.mxu0 %v1829
        %1917 = vmatprep.mubr.bf16.mxu0 %v1619
        %1918 = vmatmul.mubr.bf16.gmra.mxu0 %v1618
        %v1919 = vpop.f32.mrf.mxu0
        %v1920 = vadd.f32 %v1691, %v1919
        %v1921 = vpop.f32.mrf.mxu0
        %v1922 = vpop.f32.mrf.mxu0
        %v1923 = vpop.f32.mrf.mxu0
        %1924 = vdwg.mxu0
        %1925 = vmatprep.subr.bf16.mxu0 0
        %1926 = vmatpush1.bf16.msra.mxu0 %v1844
        %1927 = vmatprep.subr.bf16.mxu0 0
        %1928 = vmatpush1.bf16.msra.mxu0 %v1843
        %1929 = vmatprep.subr.bf16.mxu0 0
        %1930 = vmatpush1.bf16.msra.mxu0 %v1842
        %1931 = vmatprep.subr.bf16.mxu0 0
        %1932 = vmatpush1.bf16.msra.mxu0 %v1841
        %1933 = vmatprep.subr.bf16.mxu0 0
        %1934 = vmatpush1.bf16.msra.mxu0 %v1840
        %1935 = vmatprep.subr.bf16.mxu0 0
        %1936 = vmatpush1.bf16.msra.mxu0 %v1839
        %1937 = vmatprep.subr.bf16.mxu0 0
        %1938 = vmatpush1.bf16.msra.mxu0 %v1838
        %1939 = vmatprep.subr.bf16.mxu0 0
        %1940 = vmatpush1.bf16.msra.mxu0 %v1837
        %1941 = vmatprep.subr.bf16.mxu0 0
        %1942 = vmatpush2.bf16.msra.mxu0 %v1852
        %1943 = vmatprep.subr.bf16.mxu0 0
        %1944 = vmatpush2.bf16.msra.mxu0 %v1851
        %1945 = vmatprep.subr.bf16.mxu0 0
        %1946 = vmatpush2.bf16.msra.mxu0 %v1850
        %1947 = vmatprep.subr.bf16.mxu0 0
        %1948 = vmatpush2.bf16.msra.mxu0 %v1849
        %1949 = vmatprep.subr.bf16.mxu0 0
        %1950 = vmatpush2.bf16.msra.mxu0 %v1848
        %1951 = vmatprep.subr.bf16.mxu0 0
        %1952 = vmatpush2.bf16.msra.mxu0 %v1847
        %1953 = vmatprep.subr.bf16.mxu0 0
        %1954 = vmatpush2.bf16.msra.mxu0 %v1846
        %1955 = vmatprep.subr.bf16.mxu0 0
        %1956 = vmatpush2.bf16.msra.mxu0 %v1845
        %1957 = vmatprep.mubr.bf16.mxu0 %v1621
        %1958 = vmatmul.mubr.bf16.gmra.mxu0 %v1620
        %v1959 = vpop.f32.mrf.mxu0
        %v1960 = vadd.f32 %v1920, %v1959
        %v1961 = vpop.f32.mrf.mxu0
        %v1962 = vpop.f32.mrf.mxu0
        %v1963 = vpop.f32.mrf.mxu0
        %1964 = vdwg.mxu0
        %v1965 = vadd.f32 %v1960, %v1316
        %v1966 = vld [vmem:[%s10] sm:$0x1]
        %v1967 = vld [vmem:[%s11] sm:$0x1]
        %1968 = vadd.xlane.f32.xlu0 %v1965
        %v1969 = vpop.xlane.xlu0 %1968
        %v1970 = vmul.f32 %v1969, 0.0078125
        %v1971 = vsub.f32 %v1965, %v1970
        %v1972 = vmul.f32 %v1971, %v1971
        %1973 = vadd.xlane.f32.xlu0 %v1972
        %v1974 = vpop.xlane.xlu0 %1973
        %v1975 = vmul.f32 %v1974, 0.0078125
        %v1976 = vadd.f32 %v1975, 1e-05
        %v1977 = vrsqrt.pop %v1976
        %v1978 = vmul.f32 %v1971, %v1977
        %v1980 = vlaneseq
        %v1981 = vshrl.u32 %v1980, 7
        %v1982 = vsub.s32 0, %v1981
        %v1983 = vrot.slane %v1966, %v1982
        %v1985 = vmul.f32 %v1978, %v1983
        %v1987 = vlaneseq
        %v1988 = vshrl.u32 %v1987, 7
        %v1989 = vsub.s32 0, %v1988
        %v1990 = vrot.slane %v1967, %v1989
        %v1992 = vadd.f32 %v1985, %v1990
        %1993 = vst [vmem:[%s486] sm:$0xff] %v1992
        %s1994 = sand.u32 %s296, 1
        %s1995 = scalar_lea.sflag [#allocation6], %s1994
        %s1996 = sand.u32 %s296, 1
        %s1997 = smul.addr %s1996, 8
        %s1998 = scalar_lea.vmem [#allocation13], %s1997
        // Predicated region
        $region89: #{tpu_custom_call.1} parent=67 // pred_check
          %p1999 = pneg %p306
        $region90: #{tpu_custom_call.1} parent=67 // pred_check_branch
          %2001 = sbr.rel (%p1999) target = $region92
        $region91: #{tpu_custom_call.1} parent=67 // pred_region
          %s2003 = ssub.s32 128, 128
          %2004 = vsyncadd %s1995, %s2003
          %s2005 = smul.addr %s31, 128
          %s2006 = scalar_lea.hbm %s12, %s2005
          %s2008 = sshll.u32 %s1998, 4
          %s2009 = int_to_ptr.vmem [resolvable:$true] %s2008
          %2011 = dma.vmem_to_hbm [thread:$0]  %s2009, 128, %s2006, %s1995
        $region92: #{tpu_custom_call.1} parent=67 // pred_fallthru
          _
      $region68: #{tpu_custom_call.1} parent=5 // pred_fallthru
        _
      %p2012 = scmp.le.s32.totalorder 2, %s26
      // Predicated region
      $region93: #{tpu_custom_call.1} parent=5 // pred_check
        %p2013 = pneg %p2012
      $region94: #{tpu_custom_call.1} parent=5 // pred_check_branch
        %2015 = sbr.rel (%p2013) target = $region96
      $region95: #{tpu_custom_call.1} parent=5 // pred_region
        %s2016 = ssub.s32 %s26, 2
        // Predicated region
        $region97: #{tpu_custom_call.1} parent=95 // pred_check
          %p2017 = pneg %p312
        $region98: #{tpu_custom_call.1} parent=95 // pred_check_branch
          %2019 = sbr.rel (%p2017) target = $region100
        $region99: #{tpu_custom_call.1} parent=95 // pred_region
          %s2020 = sand.u32 %s297, 1
          %s2021 = scalar_lea.sflag [#allocation6], %s2020
          %s2022 = sand.u32 %s297, 1
          %s2023 = smul.addr %s2022, 8
          %s2024 = scalar_lea.vmem [#allocation13], %s2023
          %2025 = dma.done %s2021, 128
        $region100: #{tpu_custom_call.1} parent=95 // pred_fallthru
          _
      $region96: #{tpu_custom_call.1} parent=5 // pred_fallthru
        _
    $region6: #{tpu_custom_call.1} parent=1 // loop_footer
      %s30 = sadd.s32 1, %s26
    $region7: #{tpu_custom_call.1} parent=1 // loop_footer_branch
      %25 = sbr.rel target = $region3
    $region8: #{tpu_custom_call.1} parent=1 // loop_exit
      _
    %2026 = vsyncpa [#allocation5], 1
    %s2027 = scalar_lea.sflag [#allocation5], 1
    %2028 = vsyncpa %s2027, 1
    %2029 = vsyncpa [#allocation8], 1
    %2030 = vsyncpa [#allocation11], 1
    %2031 = vsyncpa [#allocation6], 1
    %s2032 = scalar_lea.sflag [#allocation6], 1
    %2033 = vsyncpa %s2032, 1

</llo_original>
